<compile_context>
chip_gen: v5e
topology: v5e:2x2
jax: 0.10.0
libtpu: 0.0.40
codegen_flags: <defaults>
</compile_context>

<pallas_src>
import jax
import jax.numpy as jnp
from jax.experimental import pallas as pl
from jax.experimental.pallas import tpu as pltpu


# --------------------------------------------------------------------------- #
# Kernel factory
# --------------------------------------------------------------------------- #
def _make_hmm_kernel(T: int, K: int, Bt: int, trans_mode: str, unroll: int):
    """Scaled HMM forward-backward on one (T, K, Bt) block.

    Layout: states on sublanes, batch on lanes (lane-dense).  The output ref
    holds raw alpha between the two passes and is overwritten with gamma.
    """
    eps = 1e-30                       # div-by-zero guard only (scale cancels in gamma)
    U = max(1, min(unroll, T - 1)) if T > 1 else 1
    nb = (T - 1) // U                 # full unrolled blocks per pass

    def _rescale(v):
        # Periodic range rescale of the carried alpha/beta.  The (approximate)
        # common factor cancels exactly in the per-timestep gamma
        # normalization, so the EUP approx reciprocal is fine here.
        s = jnp.sum(v, axis=0, keepdims=True) + eps
        return v * pl.reciprocal(s, approx=True)

    def _normalize_exact(v):
        # Final gamma write: approx reciprocal + one Newton step (~f32 exact).
        # Off the serial recursion chain, so the extra VPU work is free.
        s = jnp.sum(v, axis=0, keepdims=True) + eps
        r = pl.reciprocal(s, approx=True)
        r = r * (2.0 - s * r)
        return v * r

    def _body(x_ref, post_ref, p0, trans_fwd, trans_bwd):
        def emit(t):
            # Emissions recomputed on the fly (EUP slot is otherwise idle).
            # TODO(synk): on v5e/v6e with K >= ~32, cache emissions in a VMEM
            # scratch during the forward pass and reuse them in the backward
            # pass (halves EUP work); keep the recompute on v7x (64 MiB VMEM).
            return jax.nn.sigmoid(x_ref[t].astype(jnp.float32))      # (K, Bt)

        # ---- forward: un-normalized alpha recursion (normalization removed
        # from the serial chain; carry rescaled once per unrolled block). ----
        a = p0 * emit(0)
        post_ref[0] = a

        def fwd_block(blk, a):
            base = 1 + blk * U
            for u in range(U):                     # static unroll inside block
                t = base + u
                a = trans_fwd(a) * emit(t)
                post_ref[t] = a                    # raw alpha, off-chain store
            return _rescale(a)

        if nb > 0:
            a = jax.lax.fori_loop(0, nb, fwd_block, a)
        for t in range(1 + nb * U, T):             # static remainder
            a = trans_fwd(a) * emit(t)
            post_ref[t] = a

        # ---- backward: un-normalized beta; gamma_t = norm(alpha_t * beta_t) --
        post_ref[T - 1] = _normalize_exact(post_ref[T - 1])          # beta = 1
        beta = jnp.ones((K, Bt), jnp.float32)

        def bwd_block(blk, beta):
            base = T - 2 - blk * U
            for u in range(U):
                t = base - u
                beta = trans_bwd(emit(t + 1) * beta)
                post_ref[t] = _normalize_exact(post_ref[t] * beta)   # gamma_t
            return _rescale(beta)

        if nb > 0:
            beta = jax.lax.fori_loop(0, nb, bwd_block, beta)
        for s in range(nb * U, T - 1):             # static remainder
            t = T - 2 - s
            beta = trans_bwd(emit(t + 1) * beta)
            post_ref[t] = _normalize_exact(post_ref[t] * beta)

    if trans_mode == "banded":
        # Optional left-to-right fast path: diag + superdiag only -> O(K*Bt)
        # per step with one XLU roll.  Drops the ~1e-8 off-band softmax mass.
        # Assumes pltpu.roll matches jnp.roll semantics: roll(x, 1)[j] = x[j-1].
        def kernel(x_ref, dvec_ref, fvec_ref, bvec_ref, p0_ref, post_ref):
            dvec = dvec_ref[...]      # (K,1)  P[j, j]
            fvec = fvec_ref[...]      # (K,1)  P[j-1, j]   (fvec[0]   = 0)
            bvec = bvec_ref[...]      # (K,1)  P[i, i+1]   (bvec[K-1] = 0)

            def trans_fwd(a):         # out[j] = P[j,j]*a[j] + P[j-1,j]*a[j-1]
                return dvec * a + fvec * pltpu.roll(a, shift=1, axis=0)

            def trans_bwd(xb):        # out[i] = P[i,i]*xb[i] + P[i,i+1]*xb[i+1]
                return dvec * xb + bvec * pltpu.roll(xb, shift=K - 1, axis=0)

            _body(x_ref, post_ref, p0_ref[...], trans_fwd, trans_bwd)

    elif trans_mode == "mxu":
        def kernel(x_ref, Pt_ref, P_ref, p0_ref, post_ref):
            # Hoisted bf16 casts: the MXU is bf16-native (f32 matmul ~3x cost).
            # Operands are probabilities; f32 accumulation keeps sums accurate.
            Pt_bf = Pt_ref[...].astype(jnp.bfloat16)
            P_bf = P_ref[...].astype(jnp.bfloat16)
            # TODO(synk): for very large K, stage the constant transition matrix
            # once via pltpu.matmul_push_rhs and stream alpha/beta through
            # matmul_acc_lhs/matmul_pop to avoid re-pushing weights every step.

            def trans_fwd(a):         # (P^T @ a)
                return jnp.dot(Pt_bf, a.astype(jnp.bfloat16),
                               preferred_element_type=jnp.float32)

            def trans_bwd(xb):        # (P @ xb)
                return jnp.dot(P_bf, xb.astype(jnp.bfloat16),
                               preferred_element_type=jnp.float32)

            _body(x_ref, post_ref, p0_ref[...], trans_fwd, trans_bwd)

    else:  # "vpu": small K -- chunked broadcast+accumulate, bounded vreg pressure
        CH = 8
        nchunks = (K + CH - 1) // CH

        def kernel(x_ref, Pt_ref, P_ref, p0_ref, post_ref):
            P = P_ref[...]            # (K, K)
            Pt = Pt_ref[...]          # (K, K)
            # Hoisted loop-invariant reshapes (JAX does not CSE broadcast_in_dim).
            Pf = [P[c * CH:(c + 1) * CH, :, None] for c in range(nchunks)]
            Pb = [Pt[c * CH:(c + 1) * CH, :, None] for c in range(nchunks)]

            def _apply(chunks, v):
                # out[j,b] = sum_i chunks[i,j] * v[i,b], accumulated 8 sublanes
                # at a time so the (8,K,Bt) intermediate stays a few vregs
                # (no spills for K < 32); pure VPU work.
                acc = None
                for c in range(nchunks):
                    part = jnp.sum(
                        chunks[c] * v[c * CH:(c + 1) * CH, None, :], axis=0)
                    acc = part if acc is None else acc + part
                return acc

            def trans_fwd(a):         # out[j,b] = sum_i P[i,j]  * a[i,b]
                return _apply(Pf, a)

            def trans_bwd(xb):        # out[i,b] = sum_j Pt[j,i] * xb[j,b]
                return _apply(Pb, xb)

            _body(x_ref, post_ref, p0_ref[...], trans_fwd, trans_bwd)

    return kernel


# --------------------------------------------------------------------------- #
# VMEM / tiling helpers
# --------------------------------------------------------------------------- #
def _vmem_capacity_bytes() -> int:
    try:
        cap = getattr(pltpu.get_tpu_info(), "vmem_capacity_bytes", None)
        if cap:
            return int(cap)
    except Exception:
        pass
    return 64 << 20               # conservative fallback (v7x per-TensorCore)


def _block_vmem_bytes(T: int, K: int, b_tile: int, buffers: int) -> int:
    block = T * K * b_tile * 4    # one (T,K,b_tile) f32 slab
    params = (2 * K * K + 8 * K) * 4
    return 2 * buffers * block + params      # x block + output block


def _pick_b_tile(B: int, T: int, K: int, trans_mode: str, budget: int) -> int:
    """Largest lane-dense batch tile with bounded vreg/VMEM pressure."""
    b_round = pl.cdiv(max(B, 1), 128) * 128
    for cand in (512, 384, 256, 128):
        if cand > b_round:
            continue                                   # don't pad past the batch
        lanes = cand // 128
        if pl.cdiv(K, 8) * lanes > 16:                 # carried alpha/beta vregs
            continue
        if trans_mode == "vpu" and pl.cdiv(K, 8) * lanes > 4:
            continue                                   # (8,K,Bt) chunk intermediate
        if _block_vmem_bytes(T, K, cand, 2) + (2 << 20) > budget:
            continue
        if B > 128 and pl.cdiv(B, cand) < 2:
            continue                                   # keep >=2 tiles (v7x: 2 TCs)
        return cand
    return 128


# --------------------------------------------------------------------------- #
# Wrappers
# --------------------------------------------------------------------------- #
def hmm_forward_backward_tkb(x_tkb, P, p0, *, b_tile=None,
                             use_banded_transition: bool = False,
                             unroll: int = 8):
    """HMM forward-backward posteriors in the kernel-native (T, K, B) layout.

    x_tkb: (T, K, B) pre-sigmoid observations.  Returns gamma (T, K, B).
    """
    T, K, B = x_tkb.shape
    x_tkb = x_tkb.astype(jnp.float32)
    P = P.astype(jnp.float32)
    p0_col = p0.astype(jnp.float32).reshape(K, 1)

    trans_mode = ("banded" if use_banded_transition
                  else ("mxu" if K >= 32 else "vpu"))

    # ~48 MiB usable on v7x (64 MiB VMEM), ~96 MiB on v5e/v6e (128 MiB).
    budget = int(_vmem_capacity_bytes() * 3 // 4)
    if b_tile is None:
        b_tile = _pick_b_tile(B, T, K, trans_mode, budget)
    assert b_tile % 128 == 0, "batch tile must be lane-dense (multiple of 128)"

    Bp = pl.cdiv(B, b_tile) * b_tile
    if Bp != B:
        # Padded lanes see x=0 -> sigmoid=0.5; the recursion stays finite and
        # the padded columns are sliced off below.
        x_tkb = jnp.pad(x_tkb, ((0, 0), (0, 0), (0, Bp - B)))

    # VMEM provisioning: derive the real requirement; drop to single-buffered
    # blocks before failing; never silently clamp below the requirement.
    fudge = 2 << 20
    single_buffer = False
    need = _block_vmem_bytes(T, K, b_tile, 2)
    if need + fudge > budget:
        single_buffer = True
        need = _block_vmem_bytes(T, K, b_tile, 1)
        if need + fudge > budget:
            # TODO(synk): T-chunked variant (alpha carried in VMEM scratch,
            # alpha/gamma staged through an HBM-resident output ref via manual
            # DMA) for sequences too long to keep resident per batch tile.
            raise ValueError(
                f"HMM block (T={T}, K={K}, b_tile={b_tile}) needs "
                f"~{need >> 20} MiB of VMEM but only ~{budget >> 20} MiB is "
                f"available on this TPU generation; reduce T/K or chunk T.")
    vmem_limit = int(min(budget, max(need + fudge, 16 << 20)))

    pm = {"pipeline_mode": pl.Buffered(1)} if single_buffer else {}
    x_spec = pl.BlockSpec((T, K, b_tile), lambda b: (0, 0, b), **pm)
    out_spec = pl.BlockSpec((T, K, b_tile), lambda b: (0, 0, b), **pm)
    kk_spec = pl.BlockSpec((K, K), lambda b: (0, 0))
    k1_spec = pl.BlockSpec((K, 1), lambda b: (0, 0))

    if trans_mode == "banded":
        dvec = jnp.diagonal(P).reshape(K, 1)
        diag1 = (jnp.diagonal(P, offset=1) if K > 1
                 else jnp.zeros((0,), jnp.float32))
        zero1 = jnp.zeros((1,), jnp.float32)
        fvec = jnp.concatenate([zero1, diag1]).reshape(K, 1)   # P[j-1, j]
        bvec = jnp.concatenate([diag1, zero1]).reshape(K, 1)   # P[i, i+1]
        in_specs = [x_spec, k1_spec, k1_spec, k1_spec, k1_spec]
        operands = (x_tkb, dvec, fvec, bvec, p0_col)
    else:
        in_specs = [x_spec, kk_spec, kk_spec, k1_spec]
        operands = (x_tkb, P.T, P, p0_col)

    kernel = _make_hmm_kernel(T, K, b_tile, trans_mode, unroll)

    post = pl.pallas_call(
        kernel,
        out_shape=jax.ShapeDtypeStruct((T, K, Bp), jnp.float32),
        grid=(Bp // b_tile,),
        in_specs=in_specs,
        out_specs=out_spec,
        compiler_params=pltpu.CompilerParams(
            dimension_semantics=("parallel",),     # batch tiles across cores
            vmem_limit_bytes=vmem_limit),
    )(*operands)

    return post[:, :, :B]


def hmm_layer_forward(x, log_transition_logits, log_initial_logits, *,
                      use_banded_transition: bool = False,
                      b_tile=None, unroll: int = 8):
    """HMMLayer.forward (training mode, apply_sigmoid=True).

    x: (B, T, K) float32.  Returns posteriors (B, T, K) float32.
    """
    B, T, K = x.shape
    # Parameter glue (matches _get_transition_matrix / _get_initial_probabilities).
    P = jax.nn.softmax(log_transition_logits.astype(jnp.float32), axis=1)   # (K,K)
    p0 = jax.nn.softmax(log_initial_logits.astype(jnp.float32), axis=0)     # (K,)

    # TODO(synk): the (B,T,K)<->(T,K,B) transposes below cost one extra HBM
    # read+write of x and of the output; have the surrounding model
    # produce/consume the kernel-native layout (hmm_forward_backward_tkb) or
    # fuse these transposes into the adjacent producer/consumer op.
    x_tkb = jnp.transpose(x.astype(jnp.float32), (1, 2, 0))                 # (T,K,B)
    post_tkb = hmm_forward_backward_tkb(
        x_tkb, P, p0, b_tile=b_tile,
        use_banded_transition=use_banded_transition, unroll=unroll)
    return jnp.transpose(post_tkb, (2, 0, 1))                               # (B,T,K)


# --------------------------------------------------------------------------- #
# Module parameter init + pure-JAX reference (for validation)
# --------------------------------------------------------------------------- #
def create_left_to_right_matrix(num_states: int, self_loop_prob: float):
    """Left-to-right HMM transition matrix: self-loop + move-to-next."""
    idx = jnp.arange(num_states)
    P = jnp.zeros((num_states, num_states), jnp.float32)
    P = P.at[idx, idx].set(self_loop_prob)
    P = P.at[idx[:-1], idx[:-1] + 1].set(1.0 - self_loop_prob)
    P = P.at[num_states - 1, num_states - 1].set(1.0)   # absorbing final state
    return P


def hmm_forward_backward_ref(x, P, p0):
    """Pure-JAX reference of the scaled forward-backward (module semantics)."""
    eps = 1e-8
    xs = jax.nn.sigmoid(x.astype(jnp.float32))          # (B, T, K)
    B, T, K = xs.shape
    alphas = []
    a = p0[None, :] * xs[:, 0]
    a = a / (a.sum(-1, keepdims=True) + eps)
    alphas.append(a)
    for t in range(1, T):
        a = (a @ P) * xs[:, t]
        a = a / (a.sum(-1, keepdims=True) + eps)
        alphas.append(a)
    post = [None] * T
    g = alphas[-1]
    post[T - 1] = g / (g.sum(-1, keepdims=True) + eps)
    beta = jnp.ones((B, K), jnp.float32)
    for t in range(T - 2, -1, -1):
        xb = xs[:, t + 1] * beta
        beta = xb @ P.T
        beta = beta / (beta.sum(-1, keepdims=True) + eps)
        g = alphas[t] * beta
        post[t] = g / (g.sum(-1, keepdims=True) + eps)
    return jnp.stack(post, axis=1)                      # (B, T, K)


# --------------------------------------------------------------------------- #
# Demo / self-test
# --------------------------------------------------------------------------- #
if __name__ == "__main__":
    key = jax.random.PRNGKey(0)
    k1, k2, k3 = jax.random.split(key, 3)

    # ---- config 1: module defaults (left_to_right, 0.7), K=8 -> VPU path ----
    B, T, K = 2, 8, 8
    P_init = create_left_to_right_matrix(K, 0.7)
    log_P = jnp.log(P_init + 1e-8)                       # learnable logits init
    log_p0 = jnp.log(jnp.ones(K) / K + 1e-8)
    x = jax.random.normal(k1, (B, T, K), dtype=jnp.float32)

    post = jax.block_until_ready(hmm_layer_forward(x, log_P, log_p0))
    assert post.shape == (B, T, K)
    assert bool(jnp.all(jnp.abs(jnp.sum(post, axis=-1) - 1.0) < 1e-3))
    ref = hmm_forward_backward_ref(x, jax.nn.softmax(log_P, axis=1),
                                   jax.nn.softmax(log_p0, axis=0))
    assert bool(jnp.all(jnp.abs(post - ref) < 1e-3))

    # ---- config 2: K=32 exercises the bf16 MXU transition path --------------
    B2, T2, K2 = 4, 12, 32
    P_init2 = create_left_to_right_matrix(K2, 0.6)
    log_P2 = jnp.log(P_init2 + 1e-8)
    log_p02 = (jnp.log(jnp.ones(K2) / K2 + 1e-8)
               + 0.1 * jax.random.normal(k2, (K2,)))     # non-uniform p0
    x2 = jax.random.normal(k3, (B2, T2, K2), dtype=jnp.float32)

    post2 = jax.block_until_ready(hmm_layer_forward(x2, log_P2, log_p02))
    assert post2.shape == (B2, T2, K2)
    assert bool(jnp.all(jnp.abs(jnp.sum(post2, axis=-1) - 1.0) < 1e-3))
    ref2 = hmm_forward_backward_ref(x2, jax.nn.softmax(log_P2, axis=1),
                                    jax.nn.softmax(log_p02, axis=0))
    # bf16 transition inputs (f32 accumulation): looser elementwise tolerance.
    assert bool(jnp.all(jnp.abs(post2 - ref2) < 4e-2))

    print("KERNEL_OK")
</pallas_src>

<mosaic_0001>
module attributes {stable_mosaic.version = 11 : i64} {
  func.func @kernel(%arg0: i32, %arg1: memref<8x8x128xf32, #tpu.memory_space<vmem>>, %arg2: memref<8x8xf32, #tpu.memory_space<vmem>>, %arg3: memref<8x8xf32, #tpu.memory_space<vmem>>, %arg4: memref<8x1xf32, #tpu.memory_space<vmem>>, %arg5: memref<8x8x128xf32, #tpu.memory_space<vmem>>) attributes {dimension_semantics = [#tpu.dimension_semantics<parallel>], iteration_bounds = array<i64: 1>, scalar_prefetch = 0 : i64, scratch_operands = 0 : i64, tpu.core_type = #tpu.core_type<tc>, window_params = [{transform_indices = @transform_0, window_bounds = array<i64: 8, 8, 128>}, {pipeline_mode = #tpu.pipeline_mode<synchronous>, transform_indices = @transform_1, window_bounds = array<i64: 8, 8>}, {pipeline_mode = #tpu.pipeline_mode<synchronous>, transform_indices = @transform_2, window_bounds = array<i64: 8, 8>}, {pipeline_mode = #tpu.pipeline_mode<synchronous>, transform_indices = @transform_3, window_bounds = array<i64: 8, 1>}, {transform_indices = @transform_4, window_bounds = array<i64: 8, 8, 128>}]} {
    %c0 = arith.constant 0 : index
    %c0_0 = arith.constant 0 : index
    %0 = vector.load %arg3[%c0, %c0_0] : memref<8x8xf32, #tpu.memory_space<vmem>>, vector<8x8xf32>
    %c0_1 = arith.constant 0 : index
    %c0_2 = arith.constant 0 : index
    %1 = vector.load %arg2[%c0_1, %c0_2] : memref<8x8xf32, #tpu.memory_space<vmem>>, vector<8x8xf32>
    %2 = vector.shape_cast %0 : vector<8x8xf32> to vector<8x8x1xf32>
    %3 = vector.shape_cast %1 : vector<8x8xf32> to vector<8x8x1xf32>
    %c0_3 = arith.constant 0 : index
    %c0_4 = arith.constant 0 : index
    %4 = vector.load %arg4[%c0_3, %c0_4] : memref<8x1xf32, #tpu.memory_space<vmem>>, vector<8x1xf32>
    %c0_5 = arith.constant 0 : index
    %c0_6 = arith.constant 0 : index
    %c0_7 = arith.constant 0 : index
    %5 = vector.load %arg1[%c0_5, %c0_6, %c0_7] : memref<8x8x128xf32, #tpu.memory_space<vmem>>, vector<1x8x128xf32>
    %6 = vector.shape_cast %5 : vector<1x8x128xf32> to vector<8x128xf32>
    %7 = arith.negf %6 : vector<8x128xf32>
    %8 = math.exp %7 : vector<8x128xf32>
    %cst = arith.constant 1.000000e+00 : f32
    %9 = vector.broadcast %cst : f32 to vector<8x128xf32>
    %10 = arith.addf %9, %8 : vector<8x128xf32>
    %11 = arith.divf %9, %10 : vector<8x128xf32>
    %12 = vector.broadcast %4 : vector<8x1xf32> to vector<8x128xf32>
    %13 = arith.mulf %12, %11 : vector<8x128xf32>
    %c0_8 = arith.constant 0 : index
    %c0_9 = arith.constant 0 : index
    %c0_10 = arith.constant 0 : index
    %14 = vector.load %arg5[%c0_8, %c0_9, %c0_10] : memref<8x8x128xf32, #tpu.memory_space<vmem>>, vector<1x8x128xf32>
    %15 = vector.shape_cast %14 : vector<1x8x128xf32> to vector<8x128xf32>
    %16 = vector.shape_cast %13 : vector<8x128xf32> to vector<1x8x128xf32>
    tpu.vector_store %arg5[%c0_8, %c0_9, %c0_10], %16 {strides = array<i32>} : memref<8x8x128xf32, #tpu.memory_space<vmem>>, vector<1x8x128xf32>,
    %c0_i32 = arith.constant 0 : i32
    %c7_i32 = arith.constant 7 : i32
    %17 = arith.muli %c0_i32, %c7_i32 : i32
    %c1_i32 = arith.constant 1 : i32
    %18 = arith.addi %c1_i32, %17 : i32
    %c0_i32_11 = arith.constant 0 : i32
    %19 = arith.addi %18, %c0_i32_11 : i32
    %20 = vector.shape_cast %13 : vector<8x128xf32> to vector<8x1x128xf32>
    %21 = vector.broadcast %2 : vector<8x8x1xf32> to vector<8x8x128xf32>
    %22 = vector.broadcast %20 : vector<8x1x128xf32> to vector<8x8x128xf32>
    %23 = arith.mulf %21, %22 : vector<8x8x128xf32>
    %cst_12 = arith.constant dense<0.000000e+00> : vector<8x128xf32>
    %24 = vector.multi_reduction <add>, %23, %cst_12 [0] : vector<8x8x128xf32> to vector<8x128xf32>
    %25 = arith.index_cast %19 : i32 to index
    %c0_13 = arith.constant 0 : index
    %c0_14 = arith.constant 0 : index
    %26 = vector.load %arg1[%25, %c0_13, %c0_14] : memref<8x8x128xf32, #tpu.memory_space<vmem>>, vector<1x8x128xf32>
    %27 = vector.shape_cast %26 : vector<1x8x128xf32> to vector<8x128xf32>
    %28 = arith.negf %27 : vector<8x128xf32>
    %29 = math.exp %28 : vector<8x128xf32>
    %cst_15 = arith.constant 1.000000e+00 : f32
    %30 = vector.broadcast %cst_15 : f32 to vector<8x128xf32>
    %31 = arith.addf %30, %29 : vector<8x128xf32>
    %32 = arith.divf %30, %31 : vector<8x128xf32>
    %33 = arith.mulf %24, %32 : vector<8x128xf32>
    %34 = arith.index_cast %19 : i32 to index
    %c0_16 = arith.constant 0 : index
    %c0_17 = arith.constant 0 : index
    %35 = vector.load %arg5[%34, %c0_16, %c0_17] : memref<8x8x128xf32, #tpu.memory_space<vmem>>, vector<1x8x128xf32>
    %36 = vector.shape_cast %35 : vector<1x8x128xf32> to vector<8x128xf32>
    %37 = vector.shape_cast %33 : vector<8x128xf32> to vector<1x8x128xf32>
    tpu.vector_store %arg5[%34, %c0_16, %c0_17], %37 {strides = array<i32>} : memref<8x8x128xf32, #tpu.memory_space<vmem>>, vector<1x8x128xf32>,
    %c1_i32_18 = arith.constant 1 : i32
    %38 = arith.addi %18, %c1_i32_18 : i32
    %39 = vector.shape_cast %33 : vector<8x128xf32> to vector<8x1x128xf32>
    %40 = vector.broadcast %2 : vector<8x8x1xf32> to vector<8x8x128xf32>
    %41 = vector.broadcast %39 : vector<8x1x128xf32> to vector<8x8x128xf32>
    %42 = arith.mulf %40, %41 : vector<8x8x128xf32>
    %cst_19 = arith.constant dense<0.000000e+00> : vector<8x128xf32>
    %43 = vector.multi_reduction <add>, %42, %cst_19 [0] : vector<8x8x128xf32> to vector<8x128xf32>
    %44 = arith.index_cast %38 : i32 to index
    %c0_20 = arith.constant 0 : index
    %c0_21 = arith.constant 0 : index
    %45 = vector.load %arg1[%44, %c0_20, %c0_21] : memref<8x8x128xf32, #tpu.memory_space<vmem>>, vector<1x8x128xf32>
    %46 = vector.shape_cast %45 : vector<1x8x128xf32> to vector<8x128xf32>
    %47 = arith.negf %46 : vector<8x128xf32>
    %48 = math.exp %47 : vector<8x128xf32>
    %cst_22 = arith.constant 1.000000e+00 : f32
    %49 = vector.broadcast %cst_22 : f32 to vector<8x128xf32>
    %50 = arith.addf %49, %48 : vector<8x128xf32>
    %51 = arith.divf %49, %50 : vector<8x128xf32>
    %52 = arith.mulf %43, %51 : vector<8x128xf32>
    %53 = arith.index_cast %38 : i32 to index
    %c0_23 = arith.constant 0 : index
    %c0_24 = arith.constant 0 : index
    %54 = vector.load %arg5[%53, %c0_23, %c0_24] : memref<8x8x128xf32, #tpu.memory_space<vmem>>, vector<1x8x128xf32>
    %55 = vector.shape_cast %54 : vector<1x8x128xf32> to vector<8x128xf32>
    %56 = vector.shape_cast %52 : vector<8x128xf32> to vector<1x8x128xf32>
    tpu.vector_store %arg5[%53, %c0_23, %c0_24], %56 {strides = array<i32>} : memref<8x8x128xf32, #tpu.memory_space<vmem>>, vector<1x8x128xf32>,
    %c2_i32 = arith.constant 2 : i32
    %57 = arith.addi %18, %c2_i32 : i32
    %58 = vector.shape_cast %52 : vector<8x128xf32> to vector<8x1x128xf32>
    %59 = vector.broadcast %2 : vector<8x8x1xf32> to vector<8x8x128xf32>
    %60 = vector.broadcast %58 : vector<8x1x128xf32> to vector<8x8x128xf32>
    %61 = arith.mulf %59, %60 : vector<8x8x128xf32>
    %cst_25 = arith.constant dense<0.000000e+00> : vector<8x128xf32>
    %62 = vector.multi_reduction <add>, %61, %cst_25 [0] : vector<8x8x128xf32> to vector<8x128xf32>
    %63 = arith.index_cast %57 : i32 to index
    %c0_26 = arith.constant 0 : index
    %c0_27 = arith.constant 0 : index
    %64 = vector.load %arg1[%63, %c0_26, %c0_27] : memref<8x8x128xf32, #tpu.memory_space<vmem>>, vector<1x8x128xf32>
    %65 = vector.shape_cast %64 : vector<1x8x128xf32> to vector<8x128xf32>
    %66 = arith.negf %65 : vector<8x128xf32>
    %67 = math.exp %66 : vector<8x128xf32>
    %cst_28 = arith.constant 1.000000e+00 : f32
    %68 = vector.broadcast %cst_28 : f32 to vector<8x128xf32>
    %69 = arith.addf %68, %67 : vector<8x128xf32>
    %70 = arith.divf %68, %69 : vector<8x128xf32>
    %71 = arith.mulf %62, %70 : vector<8x128xf32>
    %72 = arith.index_cast %57 : i32 to index
    %c0_29 = arith.constant 0 : index
    %c0_30 = arith.constant 0 : index
    %73 = vector.load %arg5[%72, %c0_29, %c0_30] : memref<8x8x128xf32, #tpu.memory_space<vmem>>, vector<1x8x128xf32>
    %74 = vector.shape_cast %73 : vector<1x8x128xf32> to vector<8x128xf32>
    %75 = vector.shape_cast %71 : vector<8x128xf32> to vector<1x8x128xf32>
    tpu.vector_store %arg5[%72, %c0_29, %c0_30], %75 {strides = array<i32>} : memref<8x8x128xf32, #tpu.memory_space<vmem>>, vector<1x8x128xf32>,
    %c3_i32 = arith.constant 3 : i32
    %76 = arith.addi %18, %c3_i32 : i32
    %77 = vector.shape_cast %71 : vector<8x128xf32> to vector<8x1x128xf32>
    %78 = vector.broadcast %2 : vector<8x8x1xf32> to vector<8x8x128xf32>
    %79 = vector.broadcast %77 : vector<8x1x128xf32> to vector<8x8x128xf32>
    %80 = arith.mulf %78, %79 : vector<8x8x128xf32>
    %cst_31 = arith.constant dense<0.000000e+00> : vector<8x128xf32>
    %81 = vector.multi_reduction <add>, %80, %cst_31 [0] : vector<8x8x128xf32> to vector<8x128xf32>
    %82 = arith.index_cast %76 : i32 to index
    %c0_32 = arith.constant 0 : index
    %c0_33 = arith.constant 0 : index
    %83 = vector.load %arg1[%82, %c0_32, %c0_33] : memref<8x8x128xf32, #tpu.memory_space<vmem>>, vector<1x8x128xf32>
    %84 = vector.shape_cast %83 : vector<1x8x128xf32> to vector<8x128xf32>
    %85 = arith.negf %84 : vector<8x128xf32>
    %86 = math.exp %85 : vector<8x128xf32>
    %cst_34 = arith.constant 1.000000e+00 : f32
    %87 = vector.broadcast %cst_34 : f32 to vector<8x128xf32>
    %88 = arith.addf %87, %86 : vector<8x128xf32>
    %89 = arith.divf %87, %88 : vector<8x128xf32>
    %90 = arith.mulf %81, %89 : vector<8x128xf32>
    %91 = arith.index_cast %76 : i32 to index
    %c0_35 = arith.constant 0 : index
    %c0_36 = arith.constant 0 : index
    %92 = vector.load %arg5[%91, %c0_35, %c0_36] : memref<8x8x128xf32, #tpu.memory_space<vmem>>, vector<1x8x128xf32>
    %93 = vector.shape_cast %92 : vector<1x8x128xf32> to vector<8x128xf32>
    %94 = vector.shape_cast %90 : vector<8x128xf32> to vector<1x8x128xf32>
    tpu.vector_store %arg5[%91, %c0_35, %c0_36], %94 {strides = array<i32>} : memref<8x8x128xf32, #tpu.memory_space<vmem>>, vector<1x8x128xf32>,
    %c4_i32 = arith.constant 4 : i32
    %95 = arith.addi %18, %c4_i32 : i32
    %96 = vector.shape_cast %90 : vector<8x128xf32> to vector<8x1x128xf32>
    %97 = vector.broadcast %2 : vector<8x8x1xf32> to vector<8x8x128xf32>
    %98 = vector.broadcast %96 : vector<8x1x128xf32> to vector<8x8x128xf32>
    %99 = arith.mulf %97, %98 : vector<8x8x128xf32>
    %cst_37 = arith.constant dense<0.000000e+00> : vector<8x128xf32>
    %100 = vector.multi_reduction <add>, %99, %cst_37 [0] : vector<8x8x128xf32> to vector<8x128xf32>
    %101 = arith.index_cast %95 : i32 to index
    %c0_38 = arith.constant 0 : index
    %c0_39 = arith.constant 0 : index
    %102 = vector.load %arg1[%101, %c0_38, %c0_39] : memref<8x8x128xf32, #tpu.memory_space<vmem>>, vector<1x8x128xf32>
    %103 = vector.shape_cast %102 : vector<1x8x128xf32> to vector<8x128xf32>
    %104 = arith.negf %103 : vector<8x128xf32>
    %105 = math.exp %104 : vector<8x128xf32>
    %cst_40 = arith.constant 1.000000e+00 : f32
    %106 = vector.broadcast %cst_40 : f32 to vector<8x128xf32>
    %107 = arith.addf %106, %105 : vector<8x128xf32>
    %108 = arith.divf %106, %107 : vector<8x128xf32>
    %109 = arith.mulf %100, %108 : vector<8x128xf32>
    %110 = arith.index_cast %95 : i32 to index
    %c0_41 = arith.constant 0 : index
    %c0_42 = arith.constant 0 : index
    %111 = vector.load %arg5[%110, %c0_41, %c0_42] : memref<8x8x128xf32, #tpu.memory_space<vmem>>, vector<1x8x128xf32>
    %112 = vector.shape_cast %111 : vector<1x8x128xf32> to vector<8x128xf32>
    %113 = vector.shape_cast %109 : vector<8x128xf32> to vector<1x8x128xf32>
    tpu.vector_store %arg5[%110, %c0_41, %c0_42], %113 {strides = array<i32>} : memref<8x8x128xf32, #tpu.memory_space<vmem>>, vector<1x8x128xf32>,
    %c5_i32 = arith.constant 5 : i32
    %114 = arith.addi %18, %c5_i32 : i32
    %115 = vector.shape_cast %109 : vector<8x128xf32> to vector<8x1x128xf32>
    %116 = vector.broadcast %2 : vector<8x8x1xf32> to vector<8x8x128xf32>
    %117 = vector.broadcast %115 : vector<8x1x128xf32> to vector<8x8x128xf32>
    %118 = arith.mulf %116, %117 : vector<8x8x128xf32>
    %cst_43 = arith.constant dense<0.000000e+00> : vector<8x128xf32>
    %119 = vector.multi_reduction <add>, %118, %cst_43 [0] : vector<8x8x128xf32> to vector<8x128xf32>
    %120 = arith.index_cast %114 : i32 to index
    %c0_44 = arith.constant 0 : index
    %c0_45 = arith.constant 0 : index
    %121 = vector.load %arg1[%120, %c0_44, %c0_45] : memref<8x8x128xf32, #tpu.memory_space<vmem>>, vector<1x8x128xf32>
    %122 = vector.shape_cast %121 : vector<1x8x128xf32> to vector<8x128xf32>
    %123 = arith.negf %122 : vector<8x128xf32>
    %124 = math.exp %123 : vector<8x128xf32>
    %cst_46 = arith.constant 1.000000e+00 : f32
    %125 = vector.broadcast %cst_46 : f32 to vector<8x128xf32>
    %126 = arith.addf %125, %124 : vector<8x128xf32>
    %127 = arith.divf %125, %126 : vector<8x128xf32>
    %128 = arith.mulf %119, %127 : vector<8x128xf32>
    %129 = arith.index_cast %114 : i32 to index
    %c0_47 = arith.constant 0 : index
    %c0_48 = arith.constant 0 : index
    %130 = vector.load %arg5[%129, %c0_47, %c0_48] : memref<8x8x128xf32, #tpu.memory_space<vmem>>, vector<1x8x128xf32>
    %131 = vector.shape_cast %130 : vector<1x8x128xf32> to vector<8x128xf32>
    %132 = vector.shape_cast %128 : vector<8x128xf32> to vector<1x8x128xf32>
    tpu.vector_store %arg5[%129, %c0_47, %c0_48], %132 {strides = array<i32>} : memref<8x8x128xf32, #tpu.memory_space<vmem>>, vector<1x8x128xf32>,
    %c6_i32 = arith.constant 6 : i32
    %133 = arith.addi %18, %c6_i32 : i32
    %134 = vector.shape_cast %128 : vector<8x128xf32> to vector<8x1x128xf32>
    %135 = vector.broadcast %2 : vector<8x8x1xf32> to vector<8x8x128xf32>
    %136 = vector.broadcast %134 : vector<8x1x128xf32> to vector<8x8x128xf32>
    %137 = arith.mulf %135, %136 : vector<8x8x128xf32>
    %cst_49 = arith.constant dense<0.000000e+00> : vector<8x128xf32>
    %138 = vector.multi_reduction <add>, %137, %cst_49 [0] : vector<8x8x128xf32> to vector<8x128xf32>
    %139 = arith.index_cast %133 : i32 to index
    %c0_50 = arith.constant 0 : index
    %c0_51 = arith.constant 0 : index
    %140 = vector.load %arg1[%139, %c0_50, %c0_51] : memref<8x8x128xf32, #tpu.memory_space<vmem>>, vector<1x8x128xf32>
    %141 = vector.shape_cast %140 : vector<1x8x128xf32> to vector<8x128xf32>
    %142 = arith.negf %141 : vector<8x128xf32>
    %143 = math.exp %142 : vector<8x128xf32>
    %cst_52 = arith.constant 1.000000e+00 : f32
    %144 = vector.broadcast %cst_52 : f32 to vector<8x128xf32>
    %145 = arith.addf %144, %143 : vector<8x128xf32>
    %146 = arith.divf %144, %145 : vector<8x128xf32>
    %147 = arith.mulf %138, %146 : vector<8x128xf32>
    %148 = arith.index_cast %133 : i32 to index
    %c0_53 = arith.constant 0 : index
    %c0_54 = arith.constant 0 : index
    %149 = vector.load %arg5[%148, %c0_53, %c0_54] : memref<8x8x128xf32, #tpu.memory_space<vmem>>, vector<1x8x128xf32>
    %150 = vector.shape_cast %149 : vector<1x8x128xf32> to vector<8x128xf32>
    %151 = vector.shape_cast %147 : vector<8x128xf32> to vector<1x8x128xf32>
    tpu.vector_store %arg5[%148, %c0_53, %c0_54], %151 {strides = array<i32>} : memref<8x8x128xf32, #tpu.memory_space<vmem>>, vector<1x8x128xf32>,
    %cst_55 = arith.constant dense<0.000000e+00> : vector<128xf32>
    %152 = vector.multi_reduction <add>, %147, %cst_55 [0] : vector<8x128xf32> to vector<128xf32>
    %153 = vector.shape_cast %152 : vector<128xf32> to vector<1x128xf32>
    %cst_56 = arith.constant 1.000000e-30 : f32
    %154 = vector.broadcast %cst_56 : f32 to vector<1x128xf32>
    %155 = arith.addf %153, %154 : vector<1x128xf32>
    %156 = tpu.reciprocal %155 {approx = true} : vector<1x128xf32> -> vector<1x128xf32>
    %157 = vector.broadcast %156 : vector<1x128xf32> to vector<8x128xf32>
    %158 = arith.mulf %147, %157 : vector<8x128xf32>
    %c1_i32_57 = arith.constant 1 : i32
    %c7 = arith.constant 7 : index
    %c0_58 = arith.constant 0 : index
    %c0_59 = arith.constant 0 : index
    %159 = vector.load %arg5[%c7, %c0_58, %c0_59] : memref<8x8x128xf32, #tpu.memory_space<vmem>>, vector<1x8x128xf32>
    %160 = vector.shape_cast %159 : vector<1x8x128xf32> to vector<8x128xf32>
    %cst_60 = arith.constant dense<0.000000e+00> : vector<128xf32>
    %161 = vector.multi_reduction <add>, %160, %cst_60 [0] : vector<8x128xf32> to vector<128xf32>
    %162 = vector.shape_cast %161 : vector<128xf32> to vector<1x128xf32>
    %cst_61 = arith.constant 1.000000e-30 : f32
    %163 = vector.broadcast %cst_61 : f32 to vector<1x128xf32>
    %164 = arith.addf %162, %163 : vector<1x128xf32>
    %165 = tpu.reciprocal %164 {approx = true} : vector<1x128xf32> -> vector<1x128xf32>
    %166 = arith.mulf %164, %165 : vector<1x128xf32>
    %cst_62 = arith.constant 2.000000e+00 : f32
    %167 = vector.broadcast %cst_62 : f32 to vector<1x128xf32>
    %168 = arith.subf %167, %166 : vector<1x128xf32>
    %169 = arith.mulf %165, %168 : vector<1x128xf32>
    %170 = vector.broadcast %169 : vector<1x128xf32> to vector<8x128xf32>
    %171 = arith.mulf %160, %170 : vector<8x128xf32>
    %c7_63 = arith.constant 7 : index
    %c0_64 = arith.constant 0 : index
    %c0_65 = arith.constant 0 : index
    %172 = vector.load %arg5[%c7_63, %c0_64, %c0_65] : memref<8x8x128xf32, #tpu.memory_space<vmem>>, vector<1x8x128xf32>
    %173 = vector.shape_cast %172 : vector<1x8x128xf32> to vector<8x128xf32>
    %174 = vector.shape_cast %171 : vector<8x128xf32> to vector<1x8x128xf32>
    tpu.vector_store %arg5[%c7_63, %c0_64, %c0_65], %174 {strides = array<i32>} : memref<8x8x128xf32, #tpu.memory_space<vmem>>, vector<1x8x128xf32>,
    %cst_66 = arith.constant 1.000000e+00 : f32
    %175 = vector.broadcast %cst_66 : f32 to vector<8x128xf32>
    %c0_i32_67 = arith.constant 0 : i32
    %c7_i32_68 = arith.constant 7 : i32
    %176 = arith.muli %c0_i32_67, %c7_i32_68 : i32
    %c6_i32_69 = arith.constant 6 : i32
    %177 = arith.subi %c6_i32_69, %176 : i32
    %c0_i32_70 = arith.constant 0 : i32
    %178 = arith.subi %177, %c0_i32_70 : i32
    %c1_i32_71 = arith.constant 1 : i32
    %179 = arith.addi %178, %c1_i32_71 : i32
    %180 = arith.index_cast %179 : i32 to index
    %c0_72 = arith.constant 0 : index
    %c0_73 = arith.constant 0 : index
    %181 = vector.load %arg1[%180, %c0_72, %c0_73] : memref<8x8x128xf32, #tpu.memory_space<vmem>>, vector<1x8x128xf32>
    %182 = vector.shape_cast %181 : vector<1x8x128xf32> to vector<8x128xf32>
    %183 = arith.negf %182 : vector<8x128xf32>
    %184 = math.exp %183 : vector<8x128xf32>
    %cst_74 = arith.constant 1.000000e+00 : f32
    %185 = vector.broadcast %cst_74 : f32 to vector<8x128xf32>
    %186 = arith.addf %185, %184 : vector<8x128xf32>
    %187 = arith.divf %185, %186 : vector<8x128xf32>
    %188 = arith.mulf %187, %175 : vector<8x128xf32>
    %189 = vector.shape_cast %188 : vector<8x128xf32> to vector<8x1x128xf32>
    %190 = vector.broadcast %3 : vector<8x8x1xf32> to vector<8x8x128xf32>
    %191 = vector.broadcast %189 : vector<8x1x128xf32> to vector<8x8x128xf32>
    %192 = arith.mulf %190, %191 : vector<8x8x128xf32>
    %cst_75 = arith.constant dense<0.000000e+00> : vector<8x128xf32>
    %193 = vector.multi_reduction <add>, %192, %cst_75 [0] : vector<8x8x128xf32> to vector<8x128xf32>
    %194 = arith.index_cast %178 : i32 to index
    %c0_76 = arith.constant 0 : index
    %c0_77 = arith.constant 0 : index
    %195 = vector.load %arg5[%194, %c0_76, %c0_77] : memref<8x8x128xf32, #tpu.memory_space<vmem>>, vector<1x8x128xf32>
    %196 = vector.shape_cast %195 : vector<1x8x128xf32> to vector<8x128xf32>
    %197 = arith.mulf %196, %193 : vector<8x128xf32>
    %cst_78 = arith.constant dense<0.000000e+00> : vector<128xf32>
    %198 = vector.multi_reduction <add>, %197, %cst_78 [0] : vector<8x128xf32> to vector<128xf32>
    %199 = vector.shape_cast %198 : vector<128xf32> to vector<1x128xf32>
    %cst_79 = arith.constant 1.000000e-30 : f32
    %200 = vector.broadcast %cst_79 : f32 to vector<1x128xf32>
    %201 = arith.addf %199, %200 : vector<1x128xf32>
    %202 = tpu.reciprocal %201 {approx = true} : vector<1x128xf32> -> vector<1x128xf32>
    %203 = arith.mulf %201, %202 : vector<1x128xf32>
    %cst_80 = arith.constant 2.000000e+00 : f32
    %204 = vector.broadcast %cst_80 : f32 to vector<1x128xf32>
    %205 = arith.subf %204, %203 : vector<1x128xf32>
    %206 = arith.mulf %202, %205 : vector<1x128xf32>
    %207 = vector.broadcast %206 : vector<1x128xf32> to vector<8x128xf32>
    %208 = arith.mulf %197, %207 : vector<8x128xf32>
    %209 = arith.index_cast %178 : i32 to index
    %c0_81 = arith.constant 0 : index
    %c0_82 = arith.constant 0 : index
    %210 = vector.load %arg5[%209, %c0_81, %c0_82] : memref<8x8x128xf32, #tpu.memory_space<vmem>>, vector<1x8x128xf32>
    %211 = vector.shape_cast %210 : vector<1x8x128xf32> to vector<8x128xf32>
    %212 = vector.shape_cast %208 : vector<8x128xf32> to vector<1x8x128xf32>
    tpu.vector_store %arg5[%209, %c0_81, %c0_82], %212 {strides = array<i32>} : memref<8x8x128xf32, #tpu.memory_space<vmem>>, vector<1x8x128xf32>,
    %c1_i32_83 = arith.constant 1 : i32
    %213 = arith.subi %177, %c1_i32_83 : i32
    %c1_i32_84 = arith.constant 1 : i32
    %214 = arith.addi %213, %c1_i32_84 : i32
    %215 = arith.index_cast %214 : i32 to index
    %c0_85 = arith.constant 0 : index
    %c0_86 = arith.constant 0 : index
    %216 = vector.load %arg1[%215, %c0_85, %c0_86] : memref<8x8x128xf32, #tpu.memory_space<vmem>>, vector<1x8x128xf32>
    %217 = vector.shape_cast %216 : vector<1x8x128xf32> to vector<8x128xf32>
    %218 = arith.negf %217 : vector<8x128xf32>
    %219 = math.exp %218 : vector<8x128xf32>
    %cst_87 = arith.constant 1.000000e+00 : f32
    %220 = vector.broadcast %cst_87 : f32 to vector<8x128xf32>
    %221 = arith.addf %220, %219 : vector<8x128xf32>
    %222 = arith.divf %220, %221 : vector<8x128xf32>
    %223 = arith.mulf %222, %193 : vector<8x128xf32>
    %224 = vector.shape_cast %223 : vector<8x128xf32> to vector<8x1x128xf32>
    %225 = vector.broadcast %3 : vector<8x8x1xf32> to vector<8x8x128xf32>
    %226 = vector.broadcast %224 : vector<8x1x128xf32> to vector<8x8x128xf32>
    %227 = arith.mulf %225, %226 : vector<8x8x128xf32>
    %cst_88 = arith.constant dense<0.000000e+00> : vector<8x128xf32>
    %228 = vector.multi_reduction <add>, %227, %cst_88 [0] : vector<8x8x128xf32> to vector<8x128xf32>
    %229 = arith.index_cast %213 : i32 to index
    %c0_89 = arith.constant 0 : index
    %c0_90 = arith.constant 0 : index
    %230 = vector.load %arg5[%229, %c0_89, %c0_90] : memref<8x8x128xf32, #tpu.memory_space<vmem>>, vector<1x8x128xf32>
    %231 = vector.shape_cast %230 : vector<1x8x128xf32> to vector<8x128xf32>
    %232 = arith.mulf %231, %228 : vector<8x128xf32>
    %cst_91 = arith.constant dense<0.000000e+00> : vector<128xf32>
    %233 = vector.multi_reduction <add>, %232, %cst_91 [0] : vector<8x128xf32> to vector<128xf32>
    %234 = vector.shape_cast %233 : vector<128xf32> to vector<1x128xf32>
    %cst_92 = arith.constant 1.000000e-30 : f32
    %235 = vector.broadcast %cst_92 : f32 to vector<1x128xf32>
    %236 = arith.addf %234, %235 : vector<1x128xf32>
    %237 = tpu.reciprocal %236 {approx = true} : vector<1x128xf32> -> vector<1x128xf32>
    %238 = arith.mulf %236, %237 : vector<1x128xf32>
    %cst_93 = arith.constant 2.000000e+00 : f32
    %239 = vector.broadcast %cst_93 : f32 to vector<1x128xf32>
    %240 = arith.subf %239, %238 : vector<1x128xf32>
    %241 = arith.mulf %237, %240 : vector<1x128xf32>
    %242 = vector.broadcast %241 : vector<1x128xf32> to vector<8x128xf32>
    %243 = arith.mulf %232, %242 : vector<8x128xf32>
    %244 = arith.index_cast %213 : i32 to index
    %c0_94 = arith.constant 0 : index
    %c0_95 = arith.constant 0 : index
    %245 = vector.load %arg5[%244, %c0_94, %c0_95] : memref<8x8x128xf32, #tpu.memory_space<vmem>>, vector<1x8x128xf32>
    %246 = vector.shape_cast %245 : vector<1x8x128xf32> to vector<8x128xf32>
    %247 = vector.shape_cast %243 : vector<8x128xf32> to vector<1x8x128xf32>
    tpu.vector_store %arg5[%244, %c0_94, %c0_95], %247 {strides = array<i32>} : memref<8x8x128xf32, #tpu.memory_space<vmem>>, vector<1x8x128xf32>,
    %c2_i32_96 = arith.constant 2 : i32
    %248 = arith.subi %177, %c2_i32_96 : i32
    %c1_i32_97 = arith.constant 1 : i32
    %249 = arith.addi %248, %c1_i32_97 : i32
    %250 = arith.index_cast %249 : i32 to index
    %c0_98 = arith.constant 0 : index
    %c0_99 = arith.constant 0 : index
    %251 = vector.load %arg1[%250, %c0_98, %c0_99] : memref<8x8x128xf32, #tpu.memory_space<vmem>>, vector<1x8x128xf32>
    %252 = vector.shape_cast %251 : vector<1x8x128xf32> to vector<8x128xf32>
    %253 = arith.negf %252 : vector<8x128xf32>
    %254 = math.exp %253 : vector<8x128xf32>
    %cst_100 = arith.constant 1.000000e+00 : f32
    %255 = vector.broadcast %cst_100 : f32 to vector<8x128xf32>
    %256 = arith.addf %255, %254 : vector<8x128xf32>
    %257 = arith.divf %255, %256 : vector<8x128xf32>
    %258 = arith.mulf %257, %228 : vector<8x128xf32>
    %259 = vector.shape_cast %258 : vector<8x128xf32> to vector<8x1x128xf32>
    %260 = vector.broadcast %3 : vector<8x8x1xf32> to vector<8x8x128xf32>
    %261 = vector.broadcast %259 : vector<8x1x128xf32> to vector<8x8x128xf32>
    %262 = arith.mulf %260, %261 : vector<8x8x128xf32>
    %cst_101 = arith.constant dense<0.000000e+00> : vector<8x128xf32>
    %263 = vector.multi_reduction <add>, %262, %cst_101 [0] : vector<8x8x128xf32> to vector<8x128xf32>
    %264 = arith.index_cast %248 : i32 to index
    %c0_102 = arith.constant 0 : index
    %c0_103 = arith.constant 0 : index
    %265 = vector.load %arg5[%264, %c0_102, %c0_103] : memref<8x8x128xf32, #tpu.memory_space<vmem>>, vector<1x8x128xf32>
    %266 = vector.shape_cast %265 : vector<1x8x128xf32> to vector<8x128xf32>
    %267 = arith.mulf %266, %263 : vector<8x128xf32>
    %cst_104 = arith.constant dense<0.000000e+00> : vector<128xf32>
    %268 = vector.multi_reduction <add>, %267, %cst_104 [0] : vector<8x128xf32> to vector<128xf32>
    %269 = vector.shape_cast %268 : vector<128xf32> to vector<1x128xf32>
    %cst_105 = arith.constant 1.000000e-30 : f32
    %270 = vector.broadcast %cst_105 : f32 to vector<1x128xf32>
    %271 = arith.addf %269, %270 : vector<1x128xf32>
    %272 = tpu.reciprocal %271 {approx = true} : vector<1x128xf32> -> vector<1x128xf32>
    %273 = arith.mulf %271, %272 : vector<1x128xf32>
    %cst_106 = arith.constant 2.000000e+00 : f32
    %274 = vector.broadcast %cst_106 : f32 to vector<1x128xf32>
    %275 = arith.subf %274, %273 : vector<1x128xf32>
    %276 = arith.mulf %272, %275 : vector<1x128xf32>
    %277 = vector.broadcast %276 : vector<1x128xf32> to vector<8x128xf32>
    %278 = arith.mulf %267, %277 : vector<8x128xf32>
    %279 = arith.index_cast %248 : i32 to index
    %c0_107 = arith.constant 0 : index
    %c0_108 = arith.constant 0 : index
    %280 = vector.load %arg5[%279, %c0_107, %c0_108] : memref<8x8x128xf32, #tpu.memory_space<vmem>>, vector<1x8x128xf32>
    %281 = vector.shape_cast %280 : vector<1x8x128xf32> to vector<8x128xf32>
    %282 = vector.shape_cast %278 : vector<8x128xf32> to vector<1x8x128xf32>
    tpu.vector_store %arg5[%279, %c0_107, %c0_108], %282 {strides = array<i32>} : memref<8x8x128xf32, #tpu.memory_space<vmem>>, vector<1x8x128xf32>,
    %c3_i32_109 = arith.constant 3 : i32
    %283 = arith.subi %177, %c3_i32_109 : i32
    %c1_i32_110 = arith.constant 1 : i32
    %284 = arith.addi %283, %c1_i32_110 : i32
    %285 = arith.index_cast %284 : i32 to index
    %c0_111 = arith.constant 0 : index
    %c0_112 = arith.constant 0 : index
    %286 = vector.load %arg1[%285, %c0_111, %c0_112] : memref<8x8x128xf32, #tpu.memory_space<vmem>>, vector<1x8x128xf32>
    %287 = vector.shape_cast %286 : vector<1x8x128xf32> to vector<8x128xf32>
    %288 = arith.negf %287 : vector<8x128xf32>
    %289 = math.exp %288 : vector<8x128xf32>
    %cst_113 = arith.constant 1.000000e+00 : f32
    %290 = vector.broadcast %cst_113 : f32 to vector<8x128xf32>
    %291 = arith.addf %290, %289 : vector<8x128xf32>
    %292 = arith.divf %290, %291 : vector<8x128xf32>
    %293 = arith.mulf %292, %263 : vector<8x128xf32>
    %294 = vector.shape_cast %293 : vector<8x128xf32> to vector<8x1x128xf32>
    %295 = vector.broadcast %3 : vector<8x8x1xf32> to vector<8x8x128xf32>
    %296 = vector.broadcast %294 : vector<8x1x128xf32> to vector<8x8x128xf32>
    %297 = arith.mulf %295, %296 : vector<8x8x128xf32>
    %cst_114 = arith.constant dense<0.000000e+00> : vector<8x128xf32>
    %298 = vector.multi_reduction <add>, %297, %cst_114 [0] : vector<8x8x128xf32> to vector<8x128xf32>
    %299 = arith.index_cast %283 : i32 to index
    %c0_115 = arith.constant 0 : index
    %c0_116 = arith.constant 0 : index
    %300 = vector.load %arg5[%299, %c0_115, %c0_116] : memref<8x8x128xf32, #tpu.memory_space<vmem>>, vector<1x8x128xf32>
    %301 = vector.shape_cast %300 : vector<1x8x128xf32> to vector<8x128xf32>
    %302 = arith.mulf %301, %298 : vector<8x128xf32>
    %cst_117 = arith.constant dense<0.000000e+00> : vector<128xf32>
    %303 = vector.multi_reduction <add>, %302, %cst_117 [0] : vector<8x128xf32> to vector<128xf32>
    %304 = vector.shape_cast %303 : vector<128xf32> to vector<1x128xf32>
    %cst_118 = arith.constant 1.000000e-30 : f32
    %305 = vector.broadcast %cst_118 : f32 to vector<1x128xf32>
    %306 = arith.addf %304, %305 : vector<1x128xf32>
    %307 = tpu.reciprocal %306 {approx = true} : vector<1x128xf32> -> vector<1x128xf32>
    %308 = arith.mulf %306, %307 : vector<1x128xf32>
    %cst_119 = arith.constant 2.000000e+00 : f32
    %309 = vector.broadcast %cst_119 : f32 to vector<1x128xf32>
    %310 = arith.subf %309, %308 : vector<1x128xf32>
    %311 = arith.mulf %307, %310 : vector<1x128xf32>
    %312 = vector.broadcast %311 : vector<1x128xf32> to vector<8x128xf32>
    %313 = arith.mulf %302, %312 : vector<8x128xf32>
    %314 = arith.index_cast %283 : i32 to index
    %c0_120 = arith.constant 0 : index
    %c0_121 = arith.constant 0 : index
    %315 = vector.load %arg5[%314, %c0_120, %c0_121] : memref<8x8x128xf32, #tpu.memory_space<vmem>>, vector<1x8x128xf32>
    %316 = vector.shape_cast %315 : vector<1x8x128xf32> to vector<8x128xf32>
    %317 = vector.shape_cast %313 : vector<8x128xf32> to vector<1x8x128xf32>
    tpu.vector_store %arg5[%314, %c0_120, %c0_121], %317 {strides = array<i32>} : memref<8x8x128xf32, #tpu.memory_space<vmem>>, vector<1x8x128xf32>,
    %c4_i32_122 = arith.constant 4 : i32
    %318 = arith.subi %177, %c4_i32_122 : i32
    %c1_i32_123 = arith.constant 1 : i32
    %319 = arith.addi %318, %c1_i32_123 : i32
    %320 = arith.index_cast %319 : i32 to index
    %c0_124 = arith.constant 0 : index
    %c0_125 = arith.constant 0 : index
    %321 = vector.load %arg1[%320, %c0_124, %c0_125] : memref<8x8x128xf32, #tpu.memory_space<vmem>>, vector<1x8x128xf32>
    %322 = vector.shape_cast %321 : vector<1x8x128xf32> to vector<8x128xf32>
    %323 = arith.negf %322 : vector<8x128xf32>
    %324 = math.exp %323 : vector<8x128xf32>
    %cst_126 = arith.constant 1.000000e+00 : f32
    %325 = vector.broadcast %cst_126 : f32 to vector<8x128xf32>
    %326 = arith.addf %325, %324 : vector<8x128xf32>
    %327 = arith.divf %325, %326 : vector<8x128xf32>
    %328 = arith.mulf %327, %298 : vector<8x128xf32>
    %329 = vector.shape_cast %328 : vector<8x128xf32> to vector<8x1x128xf32>
    %330 = vector.broadcast %3 : vector<8x8x1xf32> to vector<8x8x128xf32>
    %331 = vector.broadcast %329 : vector<8x1x128xf32> to vector<8x8x128xf32>
    %332 = arith.mulf %330, %331 : vector<8x8x128xf32>
    %cst_127 = arith.constant dense<0.000000e+00> : vector<8x128xf32>
    %333 = vector.multi_reduction <add>, %332, %cst_127 [0] : vector<8x8x128xf32> to vector<8x128xf32>
    %334 = arith.index_cast %318 : i32 to index
    %c0_128 = arith.constant 0 : index
    %c0_129 = arith.constant 0 : index
    %335 = vector.load %arg5[%334, %c0_128, %c0_129] : memref<8x8x128xf32, #tpu.memory_space<vmem>>, vector<1x8x128xf32>
    %336 = vector.shape_cast %335 : vector<1x8x128xf32> to vector<8x128xf32>
    %337 = arith.mulf %336, %333 : vector<8x128xf32>
    %cst_130 = arith.constant dense<0.000000e+00> : vector<128xf32>
    %338 = vector.multi_reduction <add>, %337, %cst_130 [0] : vector<8x128xf32> to vector<128xf32>
    %339 = vector.shape_cast %338 : vector<128xf32> to vector<1x128xf32>
    %cst_131 = arith.constant 1.000000e-30 : f32
    %340 = vector.broadcast %cst_131 : f32 to vector<1x128xf32>
    %341 = arith.addf %339, %340 : vector<1x128xf32>
    %342 = tpu.reciprocal %341 {approx = true} : vector<1x128xf32> -> vector<1x128xf32>
    %343 = arith.mulf %341, %342 : vector<1x128xf32>
    %cst_132 = arith.constant 2.000000e+00 : f32
    %344 = vector.broadcast %cst_132 : f32 to vector<1x128xf32>
    %345 = arith.subf %344, %343 : vector<1x128xf32>
    %346 = arith.mulf %342, %345 : vector<1x128xf32>
    %347 = vector.broadcast %346 : vector<1x128xf32> to vector<8x128xf32>
    %348 = arith.mulf %337, %347 : vector<8x128xf32>
    %349 = arith.index_cast %318 : i32 to index
    %c0_133 = arith.constant 0 : index
    %c0_134 = arith.constant 0 : index
    %350 = vector.load %arg5[%349, %c0_133, %c0_134] : memref<8x8x128xf32, #tpu.memory_space<vmem>>, vector<1x8x128xf32>
    %351 = vector.shape_cast %350 : vector<1x8x128xf32> to vector<8x128xf32>
    %352 = vector.shape_cast %348 : vector<8x128xf32> to vector<1x8x128xf32>
    tpu.vector_store %arg5[%349, %c0_133, %c0_134], %352 {strides = array<i32>} : memref<8x8x128xf32, #tpu.memory_space<vmem>>, vector<1x8x128xf32>,
    %c5_i32_135 = arith.constant 5 : i32
    %353 = arith.subi %177, %c5_i32_135 : i32
    %c1_i32_136 = arith.constant 1 : i32
    %354 = arith.addi %353, %c1_i32_136 : i32
    %355 = arith.index_cast %354 : i32 to index
    %c0_137 = arith.constant 0 : index
    %c0_138 = arith.constant 0 : index
    %356 = vector.load %arg1[%355, %c0_137, %c0_138] : memref<8x8x128xf32, #tpu.memory_space<vmem>>, vector<1x8x128xf32>
    %357 = vector.shape_cast %356 : vector<1x8x128xf32> to vector<8x128xf32>
    %358 = arith.negf %357 : vector<8x128xf32>
    %359 = math.exp %358 : vector<8x128xf32>
    %cst_139 = arith.constant 1.000000e+00 : f32
    %360 = vector.broadcast %cst_139 : f32 to vector<8x128xf32>
    %361 = arith.addf %360, %359 : vector<8x128xf32>
    %362 = arith.divf %360, %361 : vector<8x128xf32>
    %363 = arith.mulf %362, %333 : vector<8x128xf32>
    %364 = vector.shape_cast %363 : vector<8x128xf32> to vector<8x1x128xf32>
    %365 = vector.broadcast %3 : vector<8x8x1xf32> to vector<8x8x128xf32>
    %366 = vector.broadcast %364 : vector<8x1x128xf32> to vector<8x8x128xf32>
    %367 = arith.mulf %365, %366 : vector<8x8x128xf32>
    %cst_140 = arith.constant dense<0.000000e+00> : vector<8x128xf32>
    %368 = vector.multi_reduction <add>, %367, %cst_140 [0] : vector<8x8x128xf32> to vector<8x128xf32>
    %369 = arith.index_cast %353 : i32 to index
    %c0_141 = arith.constant 0 : index
    %c0_142 = arith.constant 0 : index
    %370 = vector.load %arg5[%369, %c0_141, %c0_142] : memref<8x8x128xf32, #tpu.memory_space<vmem>>, vector<1x8x128xf32>
    %371 = vector.shape_cast %370 : vector<1x8x128xf32> to vector<8x128xf32>
    %372 = arith.mulf %371, %368 : vector<8x128xf32>
    %cst_143 = arith.constant dense<0.000000e+00> : vector<128xf32>
    %373 = vector.multi_reduction <add>, %372, %cst_143 [0] : vector<8x128xf32> to vector<128xf32>
    %374 = vector.shape_cast %373 : vector<128xf32> to vector<1x128xf32>
    %cst_144 = arith.constant 1.000000e-30 : f32
    %375 = vector.broadcast %cst_144 : f32 to vector<1x128xf32>
    %376 = arith.addf %374, %375 : vector<1x128xf32>
    %377 = tpu.reciprocal %376 {approx = true} : vector<1x128xf32> -> vector<1x128xf32>
    %378 = arith.mulf %376, %377 : vector<1x128xf32>
    %cst_145 = arith.constant 2.000000e+00 : f32
    %379 = vector.broadcast %cst_145 : f32 to vector<1x128xf32>
    %380 = arith.subf %379, %378 : vector<1x128xf32>
    %381 = arith.mulf %377, %380 : vector<1x128xf32>
    %382 = vector.broadcast %381 : vector<1x128xf32> to vector<8x128xf32>
    %383 = arith.mulf %372, %382 : vector<8x128xf32>
    %384 = arith.index_cast %353 : i32 to index
    %c0_146 = arith.constant 0 : index
    %c0_147 = arith.constant 0 : index
    %385 = vector.load %arg5[%384, %c0_146, %c0_147] : memref<8x8x128xf32, #tpu.memory_space<vmem>>, vector<1x8x128xf32>
    %386 = vector.shape_cast %385 : vector<1x8x128xf32> to vector<8x128xf32>
    %387 = vector.shape_cast %383 : vector<8x128xf32> to vector<1x8x128xf32>
    tpu.vector_store %arg5[%384, %c0_146, %c0_147], %387 {strides = array<i32>} : memref<8x8x128xf32, #tpu.memory_space<vmem>>, vector<1x8x128xf32>,
    %c6_i32_148 = arith.constant 6 : i32
    %388 = arith.subi %177, %c6_i32_148 : i32
    %c1_i32_149 = arith.constant 1 : i32
    %389 = arith.addi %388, %c1_i32_149 : i32
    %390 = arith.index_cast %389 : i32 to index
    %c0_150 = arith.constant 0 : index
    %c0_151 = arith.constant 0 : index
    %391 = vector.load %arg1[%390, %c0_150, %c0_151] : memref<8x8x128xf32, #tpu.memory_space<vmem>>, vector<1x8x128xf32>
    %392 = vector.shape_cast %391 : vector<1x8x128xf32> to vector<8x128xf32>
    %393 = arith.negf %392 : vector<8x128xf32>
    %394 = math.exp %393 : vector<8x128xf32>
    %cst_152 = arith.constant 1.000000e+00 : f32
    %395 = vector.broadcast %cst_152 : f32 to vector<8x128xf32>
    %396 = arith.addf %395, %394 : vector<8x128xf32>
    %397 = arith.divf %395, %396 : vector<8x128xf32>
    %398 = arith.mulf %397, %368 : vector<8x128xf32>
    %399 = vector.shape_cast %398 : vector<8x128xf32> to vector<8x1x128xf32>
    %400 = vector.broadcast %3 : vector<8x8x1xf32> to vector<8x8x128xf32>
    %401 = vector.broadcast %399 : vector<8x1x128xf32> to vector<8x8x128xf32>
    %402 = arith.mulf %400, %401 : vector<8x8x128xf32>
    %cst_153 = arith.constant dense<0.000000e+00> : vector<8x128xf32>
    %403 = vector.multi_reduction <add>, %402, %cst_153 [0] : vector<8x8x128xf32> to vector<8x128xf32>
    %404 = arith.index_cast %388 : i32 to index
    %c0_154 = arith.constant 0 : index
    %c0_155 = arith.constant 0 : index
    %405 = vector.load %arg5[%404, %c0_154, %c0_155] : memref<8x8x128xf32, #tpu.memory_space<vmem>>, vector<1x8x128xf32>
    %406 = vector.shape_cast %405 : vector<1x8x128xf32> to vector<8x128xf32>
    %407 = arith.mulf %406, %403 : vector<8x128xf32>
    %cst_156 = arith.constant dense<0.000000e+00> : vector<128xf32>
    %408 = vector.multi_reduction <add>, %407, %cst_156 [0] : vector<8x128xf32> to vector<128xf32>
    %409 = vector.shape_cast %408 : vector<128xf32> to vector<1x128xf32>
    %cst_157 = arith.constant 1.000000e-30 : f32
    %410 = vector.broadcast %cst_157 : f32 to vector<1x128xf32>
    %411 = arith.addf %409, %410 : vector<1x128xf32>
    %412 = tpu.reciprocal %411 {approx = true} : vector<1x128xf32> -> vector<1x128xf32>
    %413 = arith.mulf %411, %412 : vector<1x128xf32>
    %cst_158 = arith.constant 2.000000e+00 : f32
    %414 = vector.broadcast %cst_158 : f32 to vector<1x128xf32>
    %415 = arith.subf %414, %413 : vector<1x128xf32>
    %416 = arith.mulf %412, %415 : vector<1x128xf32>
    %417 = vector.broadcast %416 : vector<1x128xf32> to vector<8x128xf32>
    %418 = arith.mulf %407, %417 : vector<8x128xf32>
    %419 = arith.index_cast %388 : i32 to index
    %c0_159 = arith.constant 0 : index
    %c0_160 = arith.constant 0 : index
    %420 = vector.load %arg5[%419, %c0_159, %c0_160] : memref<8x8x128xf32, #tpu.memory_space<vmem>>, vector<1x8x128xf32>
    %421 = vector.shape_cast %420 : vector<1x8x128xf32> to vector<8x128xf32>
    %422 = vector.shape_cast %418 : vector<8x128xf32> to vector<1x8x128xf32>
    tpu.vector_store %arg5[%419, %c0_159, %c0_160], %422 {strides = array<i32>} : memref<8x8x128xf32, #tpu.memory_space<vmem>>, vector<1x8x128xf32>,
    %cst_161 = arith.constant dense<0.000000e+00> : vector<128xf32>
    %423 = vector.multi_reduction <add>, %403, %cst_161 [0] : vector<8x128xf32> to vector<128xf32>
    %424 = vector.shape_cast %423 : vector<128xf32> to vector<1x128xf32>
    %cst_162 = arith.constant 1.000000e-30 : f32
    %425 = vector.broadcast %cst_162 : f32 to vector<1x128xf32>
    %426 = arith.addf %424, %425 : vector<1x128xf32>
    %427 = tpu.reciprocal %426 {approx = true} : vector<1x128xf32> -> vector<1x128xf32>
    %428 = vector.broadcast %427 : vector<1x128xf32> to vector<8x128xf32>
    %429 = arith.mulf %403, %428 : vector<8x128xf32>
    %c1_i32_163 = arith.constant 1 : i32
    return
  }
  func.func @transform_0(%arg0: i32) -> (i32, i32, i32) {
    %c0_i32 = arith.constant 0 : i32
    %c0_i32_0 = arith.constant 0 : i32
    %c0_i32_1 = arith.constant 0 : i32
    return %c0_i32, %c0_i32_0, %arg0 : i32, i32, i32
  }
  func.func @transform_1(%arg0: i32) -> (i32, i32) {
    %c0_i32 = arith.constant 0 : i32
    %c0_i32_0 = arith.constant 0 : i32
    %c0_i32_1 = arith.constant 0 : i32
    return %c0_i32, %c0_i32_0 : i32, i32
  }
  func.func @transform_2(%arg0: i32) -> (i32, i32) {
    %c0_i32 = arith.constant 0 : i32
    %c0_i32_0 = arith.constant 0 : i32
    %c0_i32_1 = arith.constant 0 : i32
    return %c0_i32, %c0_i32_0 : i32, i32
  }
  func.func @transform_3(%arg0: i32) -> (i32, i32) {
    %c0_i32 = arith.constant 0 : i32
    %c0_i32_0 = arith.constant 0 : i32
    %c0_i32_1 = arith.constant 0 : i32
    return %c0_i32, %c0_i32_0 : i32, i32
  }
  func.func @transform_4(%arg0: i32) -> (i32, i32, i32) {
    %c0_i32 = arith.constant 0 : i32
    %c0_i32_0 = arith.constant 0 : i32
    %c0_i32_1 = arith.constant 0 : i32
    return %c0_i32, %c0_i32_0, %arg0 : i32, i32, i32
  }
}

</mosaic_0001>

<llo_original>
// kernel: tpu_custom_call.1
$region0: #{tpu_custom_call.1}
  #allocation0 [shape = 'u32[]', space=smem, size = 0x4, offset = 0x4, fixed_abs, tag = 'smem constant byte address 0x4 - core index']
  #allocation1 [shape = 'u32[72,128]{1,0:T(1,128)}', space=vmem, size = 0x9000, scoped, tag = 'internal scratch']
  %s0 = inlined_call_operand.hbm [shape: f32[8,8,128], index: 0, kind: input, shape index: {}]
  %s1 = inlined_call_operand.vmem [shape: f32[8,8], index: 1, kind: input, shape index: {}]
  %s2 = inlined_call_operand.hbm [shape: f32[8,8], index: 2, kind: input, shape index: {}]
  %s3 = inlined_call_operand.vmem [shape: f32[8,1], index: 3, kind: input, shape index: {}]
  %s4 = inlined_call_operand.hbm [shape: f32[8,8,128], index: 4, kind: output, shape index: {}]
  %s5 = sld [smem:[#allocation0]]
  $region34: #{tpu_custom_call.1} parent=0
    _
  %s7 = ssub.s32 1, %s5
  %s8 = scalar_select 0, %s7, %s5
  $region1: #{tpu_custom_call.1} parent=0
    #allocation2 [shape = 'u8[32768]{0}', space=vmem, size = 0x8000, scoped, tag = 'input window, operand 0, single buffered']
    #allocation3 [shape = 's32[1]{0}', space=sflag, size = 0x4, scoped, tag = 'scoped memory for tpu_custom_call.1']
    #allocation4 [shape = 's32[1]{0}', space=sflag, size = 0x4, scoped, tag = 'scoped memory for tpu_custom_call.1']
    #allocation5 [shape = 'u8[4096]{0}', space=vmem, size = 0x1000, scoped, tag = 'input window, operand 2, single buffered']
    #allocation6 [shape = 's32[1]{0}', space=sflag, size = 0x4, scoped, tag = 'scoped memory for tpu_custom_call.1']
    #allocation7 [shape = 'u8[32768]{0}', space=vmem, size = 0x8000, scoped, tag = 'output window, operand 0, single buffered']
    %9 = vsyncpa [#allocation3], 0
    %10 = vsyncpa [#allocation6], 0
    %11 = vsyncpa [#allocation4], 0
    // Predicated region
    $region2: #{tpu_custom_call.1} parent=1 // pred_check
      _
    $region3: #{tpu_custom_call.1} parent=1 // pred_check_branch
      %13 = sbr.rel (0) target = $region5
    $region4: #{tpu_custom_call.1} parent=1 // pred_region
      %15 = vsyncadd [#allocation3], 0
      %s16 = sshll.u32 %s0, 4
      %s17 = int_to_ptr.hbm [resolvable:$true] %s16
      %s18 = sshll.u32 [#allocation2], 4
      %s19 = int_to_ptr.vmem [resolvable:$true] %s18
      %24 = dma.hbm_to_vmem [thread:$0]  %s17, 1024, %s19, [#allocation3], 128, 128, 8
    $region5: #{tpu_custom_call.1} parent=1 // pred_fallthru
      _
    // Predicated region
    $region6: #{tpu_custom_call.1} parent=1 // pred_check
      _
    $region7: #{tpu_custom_call.1} parent=1 // pred_check_branch
      %26 = sbr.rel (0) target = $region9
    $region8: #{tpu_custom_call.1} parent=1 // pred_region
      _
    $region9: #{tpu_custom_call.1} parent=1 // pred_fallthru
      _
    // Predicated region
    $region10: #{tpu_custom_call.1} parent=1 // pred_check
      _
    $region11: #{tpu_custom_call.1} parent=1 // pred_check_branch
      %28 = sbr.rel (0) target = $region13
    $region12: #{tpu_custom_call.1} parent=1 // pred_region
      %30 = vsyncadd [#allocation6], 0
      %s32 = sshll.u32 %s2, 4
      %s33 = int_to_ptr.hbm [resolvable:$true] %s32
      %s34 = sshll.u32 [#allocation5], 4
      %s35 = int_to_ptr.vmem [resolvable:$true] %s34
      %37 = dma.hbm_to_vmem [thread:$0]  %s33, 128, %s35, [#allocation6]
    $region13: #{tpu_custom_call.1} parent=1 // pred_fallthru
      _
    // Predicated region
    $region14: #{tpu_custom_call.1} parent=1 // pred_check
      _
    $region15: #{tpu_custom_call.1} parent=1 // pred_check_branch
      %39 = sbr.rel (0) target = $region17
    $region16: #{tpu_custom_call.1} parent=1 // pred_region
      _
    $region17: #{tpu_custom_call.1} parent=1 // pred_fallthru
      _
    // Predicated region
    $region18: #{tpu_custom_call.1} parent=1 // pred_check
      _
    $region19: #{tpu_custom_call.1} parent=1 // pred_check_branch
      %41 = sbr.rel (0) target = $region21
    $region20: #{tpu_custom_call.1} parent=1 // pred_region
      %43 = dma.done [#allocation3], 1024
    $region21: #{tpu_custom_call.1} parent=1 // pred_fallthru
      _
    // Predicated region
    $region22: #{tpu_custom_call.1} parent=1 // pred_check
      _
    $region23: #{tpu_custom_call.1} parent=1 // pred_check_branch
      %45 = sbr.rel (0) target = $region25
    $region24: #{tpu_custom_call.1} parent=1 // pred_region
      %47 = dma.done [#allocation6], 128
    $region25: #{tpu_custom_call.1} parent=1 // pred_fallthru
      _
    %v48 = vld [vmem:[#allocation5] sm:$0xff]
    %v49 = vld [vmem:[%s1] sm:$0xff]
    %v50 = vperm.slane %v48, 0
    %v51 = vlaneseq
    %v52 = vshrl.u32 %v51, 7
    %54 = vset.pattern.permute.xlu0 %v52
    %55 = vperm.xlu0 %54, %v50
    %v56 = vpop.permute.xlu0 %55
    %v57 = vperm.slane %v48, 1
    %v58 = vlaneseq
    %v59 = vshrl.u32 %v58, 7
    %61 = vset.pattern.permute.xlu0 %v59
    %62 = vperm.xlu0 %61, %v57
    %v63 = vpop.permute.xlu0 %62
    %v64 = vperm.slane %v48, 2
    %v65 = vlaneseq
    %v66 = vshrl.u32 %v65, 7
    %68 = vset.pattern.permute.xlu0 %v66
    %69 = vperm.xlu0 %68, %v64
    %v70 = vpop.permute.xlu0 %69
    %v71 = vperm.slane %v48, 3
    %v72 = vlaneseq
    %v73 = vshrl.u32 %v72, 7
    %75 = vset.pattern.permute.xlu0 %v73
    %76 = vperm.xlu0 %75, %v71
    %v77 = vpop.permute.xlu0 %76
    %v78 = vperm.slane %v48, 4
    %v79 = vlaneseq
    %v80 = vshrl.u32 %v79, 7
    %82 = vset.pattern.permute.xlu0 %v80
    %83 = vperm.xlu0 %82, %v78
    %v84 = vpop.permute.xlu0 %83
    %v85 = vperm.slane %v48, 5
    %v86 = vlaneseq
    %v87 = vshrl.u32 %v86, 7
    %89 = vset.pattern.permute.xlu0 %v87
    %90 = vperm.xlu0 %89, %v85
    %v91 = vpop.permute.xlu0 %90
    %v92 = vperm.slane %v48, 6
    %v93 = vlaneseq
    %v94 = vshrl.u32 %v93, 7
    %96 = vset.pattern.permute.xlu0 %v94
    %97 = vperm.xlu0 %96, %v92
    %v98 = vpop.permute.xlu0 %97
    %v99 = vperm.slane %v48, 7
    %v100 = vlaneseq
    %v101 = vshrl.u32 %v100, 7
    %103 = vset.pattern.permute.xlu0 %v101
    %104 = vperm.xlu0 %103, %v99
    %v105 = vpop.permute.xlu0 %104
    %v106 = vperm.slane %v49, 0
    %v107 = vlaneseq
    %v108 = vshrl.u32 %v107, 7
    %110 = vset.pattern.permute.xlu0 %v108
    %111 = vperm.xlu0 %110, %v106
    %v112 = vpop.permute.xlu0 %111
    %v113 = vperm.slane %v49, 1
    %v114 = vlaneseq
    %v115 = vshrl.u32 %v114, 7
    %117 = vset.pattern.permute.xlu0 %v115
    %118 = vperm.xlu0 %117, %v113
    %v119 = vpop.permute.xlu0 %118
    %v120 = vperm.slane %v49, 2
    %v121 = vlaneseq
    %v122 = vshrl.u32 %v121, 7
    %124 = vset.pattern.permute.xlu0 %v122
    %125 = vperm.xlu0 %124, %v120
    %v126 = vpop.permute.xlu0 %125
    %v127 = vperm.slane %v49, 3
    %v128 = vlaneseq
    %v129 = vshrl.u32 %v128, 7
    %131 = vset.pattern.permute.xlu0 %v129
    %132 = vperm.xlu0 %131, %v127
    %v133 = vpop.permute.xlu0 %132
    %v134 = vperm.slane %v49, 4
    %v135 = vlaneseq
    %v136 = vshrl.u32 %v135, 7
    %138 = vset.pattern.permute.xlu0 %v136
    %139 = vperm.xlu0 %138, %v134
    %v140 = vpop.permute.xlu0 %139
    %v141 = vperm.slane %v49, 5
    %v142 = vlaneseq
    %v143 = vshrl.u32 %v142, 7
    %145 = vset.pattern.permute.xlu0 %v143
    %146 = vperm.xlu0 %145, %v141
    %v147 = vpop.permute.xlu0 %146
    %v148 = vperm.slane %v49, 6
    %v149 = vlaneseq
    %v150 = vshrl.u32 %v149, 7
    %152 = vset.pattern.permute.xlu0 %v150
    %153 = vperm.xlu0 %152, %v148
    %v154 = vpop.permute.xlu0 %153
    %v155 = vperm.slane %v49, 7
    %v156 = vlaneseq
    %v157 = vshrl.u32 %v156, 7
    %159 = vset.pattern.permute.xlu0 %v157
    %160 = vperm.xlu0 %159, %v155
    %v161 = vpop.permute.xlu0 %160
    %v162 = vld [vmem:[%s3] sm:$0xff]
    %v163 = vld [vmem:[#allocation2] sm:$0xff]
    %v164 = vxor.u32 %v163, 2147483648
    %v165 = vmul.f32 %v164, 1.442695
    %v166 = vpow.pop %v165
    %v167 = vadd.f32 %v166, 1.0
    %v168 = vrcp.pop %v167
    %v169 = vmul.f32 %v167, %v168
    %v170 = vsub.f32 1.0, %v169
    %v171 = vmul.f32 %v168, %v170
    %v172 = vadd.f32 %v168, %v171
    %vm173 = vweird.f32 %v167
    %vm174 = vweird.f32 %v168
    %vm175 = vmor %vm173, %vm174
    %v176 = vsel %vm175, %v168, %v172
    %v177 = vand.u32 2147483647, %v167
    %vm178 = vcmp.eq.f32.partialorder %v177, 8.507059e+37
    %v179 = vand.u32 %v167, 2147483648
    %v180 = vor.u32 1.1754944e-38, %v179
    %v181 = vsel %vm178, %v180, %v176
    %v182 = vmul.f32 1.0, %v181
    %184 = vset.pattern.permute.xlu0 0
    %185 = vperm.xlu0 %184, %v162
    %v186 = vpop.permute.xlu0 %185
    %v188 = vmul.f32 %v186, %v182
    %189 = vst [vmem:[#allocation7] sm:$0xff] %v188
    %v191 = vrot.slane %v188, 1
    %v192 = vrot.slane %v188, 2
    %v193 = vrot.slane %v188, 3
    %v194 = vrot.slane %v188, 4
    %v195 = vrot.slane %v188, 5
    %v196 = vrot.slane %v188, 6
    %v197 = vrot.slane %v188, 7
    %v198 = vperm.slane %v188, 0
    %v199 = vperm.slane %v191, 0
    %v200 = vperm.slane %v192, 0
    %v201 = vperm.slane %v193, 0
    %v202 = vperm.slane %v194, 0
    %v203 = vperm.slane %v195, 0
    %v204 = vperm.slane %v196, 0
    %v205 = vperm.slane %v197, 0
    %v214 = vmul.f32 %v56, %v198
    %v215 = vmul.f32 %v63, %v199
    %v216 = vmul.f32 %v70, %v200
    %v217 = vmul.f32 %v77, %v201
    %v218 = vmul.f32 %v84, %v202
    %v219 = vmul.f32 %v91, %v203
    %v220 = vmul.f32 %v98, %v204
    %v221 = vmul.f32 %v105, %v205
    %v222 = vadd.f32 %v214, %v215
    %v223 = vadd.f32 %v222, %v216
    %v224 = vadd.f32 %v223, %v217
    %v225 = vadd.f32 %v224, %v218
    %v226 = vadd.f32 %v225, %v219
    %v227 = vadd.f32 %v226, %v220
    %v228 = vadd.f32 %v227, %v221
    %s229 = scalar_lea.vmem [#allocation2], 8
    %v230 = vld [vmem:[%s229] sm:$0xff]
    %v231 = vxor.u32 %v230, 2147483648
    %v232 = vmul.f32 %v231, 1.442695
    %v233 = vpow.pop %v232
    %v234 = vadd.f32 %v233, 1.0
    %v235 = vrcp.pop %v234
    %v236 = vmul.f32 %v234, %v235
    %v237 = vsub.f32 1.0, %v236
    %v238 = vmul.f32 %v235, %v237
    %v239 = vadd.f32 %v235, %v238
    %vm240 = vweird.f32 %v234
    %vm241 = vweird.f32 %v235
    %vm242 = vmor %vm240, %vm241
    %v243 = vsel %vm242, %v235, %v239
    %v244 = vand.u32 2147483647, %v234
    %vm245 = vcmp.eq.f32.partialorder %v244, 8.507059e+37
    %v246 = vand.u32 %v234, 2147483648
    %v247 = vor.u32 1.1754944e-38, %v246
    %v248 = vsel %vm245, %v247, %v243
    %v249 = vmul.f32 1.0, %v248
    %v250 = vmul.f32 %v228, %v249
    %s251 = scalar_lea.vmem [#allocation7], 8
    %252 = vst [vmem:[%s251] sm:$0xff] %v250
    %v254 = vrot.slane %v250, 1
    %v255 = vrot.slane %v250, 2
    %v256 = vrot.slane %v250, 3
    %v257 = vrot.slane %v250, 4
    %v258 = vrot.slane %v250, 5
    %v259 = vrot.slane %v250, 6
    %v260 = vrot.slane %v250, 7
    %v261 = vperm.slane %v250, 0
    %v262 = vperm.slane %v254, 0
    %v263 = vperm.slane %v255, 0
    %v264 = vperm.slane %v256, 0
    %v265 = vperm.slane %v257, 0
    %v266 = vperm.slane %v258, 0
    %v267 = vperm.slane %v259, 0
    %v268 = vperm.slane %v260, 0
    %v277 = vmul.f32 %v56, %v261
    %v278 = vmul.f32 %v63, %v262
    %v279 = vmul.f32 %v70, %v263
    %v280 = vmul.f32 %v77, %v264
    %v281 = vmul.f32 %v84, %v265
    %v282 = vmul.f32 %v91, %v266
    %v283 = vmul.f32 %v98, %v267
    %v284 = vmul.f32 %v105, %v268
    %v285 = vadd.f32 %v277, %v278
    %v286 = vadd.f32 %v285, %v279
    %v287 = vadd.f32 %v286, %v280
    %v288 = vadd.f32 %v287, %v281
    %v289 = vadd.f32 %v288, %v282
    %v290 = vadd.f32 %v289, %v283
    %v291 = vadd.f32 %v290, %v284
    %s292 = scalar_lea.vmem [#allocation2], 16
    %v293 = vld [vmem:[%s292] sm:$0xff]
    %v294 = vxor.u32 %v293, 2147483648
    %v295 = vmul.f32 %v294, 1.442695
    %v296 = vpow.pop %v295
    %v297 = vadd.f32 %v296, 1.0
    %v298 = vrcp.pop %v297
    %v299 = vmul.f32 %v297, %v298
    %v300 = vsub.f32 1.0, %v299
    %v301 = vmul.f32 %v298, %v300
    %v302 = vadd.f32 %v298, %v301
    %vm303 = vweird.f32 %v297
    %vm304 = vweird.f32 %v298
    %vm305 = vmor %vm303, %vm304
    %v306 = vsel %vm305, %v298, %v302
    %v307 = vand.u32 2147483647, %v297
    %vm308 = vcmp.eq.f32.partialorder %v307, 8.507059e+37
    %v309 = vand.u32 %v297, 2147483648
    %v310 = vor.u32 1.1754944e-38, %v309
    %v311 = vsel %vm308, %v310, %v306
    %v312 = vmul.f32 1.0, %v311
    %v313 = vmul.f32 %v291, %v312
    %s314 = scalar_lea.vmem [#allocation7], 16
    %315 = vst [vmem:[%s314] sm:$0xff] %v313
    %v317 = vrot.slane %v313, 1
    %v318 = vrot.slane %v313, 2
    %v319 = vrot.slane %v313, 3
    %v320 = vrot.slane %v313, 4
    %v321 = vrot.slane %v313, 5
    %v322 = vrot.slane %v313, 6
    %v323 = vrot.slane %v313, 7
    %v324 = vperm.slane %v313, 0
    %v325 = vperm.slane %v317, 0
    %v326 = vperm.slane %v318, 0
    %v327 = vperm.slane %v319, 0
    %v328 = vperm.slane %v320, 0
    %v329 = vperm.slane %v321, 0
    %v330 = vperm.slane %v322, 0
    %v331 = vperm.slane %v323, 0
    %v340 = vmul.f32 %v56, %v324
    %v341 = vmul.f32 %v63, %v325
    %v342 = vmul.f32 %v70, %v326
    %v343 = vmul.f32 %v77, %v327
    %v344 = vmul.f32 %v84, %v328
    %v345 = vmul.f32 %v91, %v329
    %v346 = vmul.f32 %v98, %v330
    %v347 = vmul.f32 %v105, %v331
    %v348 = vadd.f32 %v340, %v341
    %v349 = vadd.f32 %v348, %v342
    %v350 = vadd.f32 %v349, %v343
    %v351 = vadd.f32 %v350, %v344
    %v352 = vadd.f32 %v351, %v345
    %v353 = vadd.f32 %v352, %v346
    %v354 = vadd.f32 %v353, %v347
    %s355 = scalar_lea.vmem [#allocation2], 24
    %v356 = vld [vmem:[%s355] sm:$0xff]
    %v357 = vxor.u32 %v356, 2147483648
    %v358 = vmul.f32 %v357, 1.442695
    %v359 = vpow.pop %v358
    %v360 = vadd.f32 %v359, 1.0
    %v361 = vrcp.pop %v360
    %v362 = vmul.f32 %v360, %v361
    %v363 = vsub.f32 1.0, %v362
    %v364 = vmul.f32 %v361, %v363
    %v365 = vadd.f32 %v361, %v364
    %vm366 = vweird.f32 %v360
    %vm367 = vweird.f32 %v361
    %vm368 = vmor %vm366, %vm367
    %v369 = vsel %vm368, %v361, %v365
    %v370 = vand.u32 2147483647, %v360
    %vm371 = vcmp.eq.f32.partialorder %v370, 8.507059e+37
    %v372 = vand.u32 %v360, 2147483648
    %v373 = vor.u32 1.1754944e-38, %v372
    %v374 = vsel %vm371, %v373, %v369
    %v375 = vmul.f32 1.0, %v374
    %v376 = vmul.f32 %v354, %v375
    %s377 = scalar_lea.vmem [#allocation7], 24
    %378 = vst [vmem:[%s377] sm:$0xff] %v376
    %v380 = vrot.slane %v376, 1
    %v381 = vrot.slane %v376, 2
    %v382 = vrot.slane %v376, 3
    %v383 = vrot.slane %v376, 4
    %v384 = vrot.slane %v376, 5
    %v385 = vrot.slane %v376, 6
    %v386 = vrot.slane %v376, 7
    %v387 = vperm.slane %v376, 0
    %v388 = vperm.slane %v380, 0
    %v389 = vperm.slane %v381, 0
    %v390 = vperm.slane %v382, 0
    %v391 = vperm.slane %v383, 0
    %v392 = vperm.slane %v384, 0
    %v393 = vperm.slane %v385, 0
    %v394 = vperm.slane %v386, 0
    %v403 = vmul.f32 %v56, %v387
    %v404 = vmul.f32 %v63, %v388
    %v405 = vmul.f32 %v70, %v389
    %v406 = vmul.f32 %v77, %v390
    %v407 = vmul.f32 %v84, %v391
    %v408 = vmul.f32 %v91, %v392
    %v409 = vmul.f32 %v98, %v393
    %v410 = vmul.f32 %v105, %v394
    %v411 = vadd.f32 %v403, %v404
    %v412 = vadd.f32 %v411, %v405
    %v413 = vadd.f32 %v412, %v406
    %v414 = vadd.f32 %v413, %v407
    %v415 = vadd.f32 %v414, %v408
    %v416 = vadd.f32 %v415, %v409
    %v417 = vadd.f32 %v416, %v410
    %s418 = scalar_lea.vmem [#allocation2], 32
    %v419 = vld [vmem:[%s418] sm:$0xff]
    %v420 = vxor.u32 %v419, 2147483648
    %v421 = vmul.f32 %v420, 1.442695
    %v422 = vpow.pop %v421
    %v423 = vadd.f32 %v422, 1.0
    %v424 = vrcp.pop %v423
    %v425 = vmul.f32 %v423, %v424
    %v426 = vsub.f32 1.0, %v425
    %v427 = vmul.f32 %v424, %v426
    %v428 = vadd.f32 %v424, %v427
    %vm429 = vweird.f32 %v423
    %vm430 = vweird.f32 %v424
    %vm431 = vmor %vm429, %vm430
    %v432 = vsel %vm431, %v424, %v428
    %v433 = vand.u32 2147483647, %v423
    %vm434 = vcmp.eq.f32.partialorder %v433, 8.507059e+37
    %v435 = vand.u32 %v423, 2147483648
    %v436 = vor.u32 1.1754944e-38, %v435
    %v437 = vsel %vm434, %v436, %v432
    %v438 = vmul.f32 1.0, %v437
    %v439 = vmul.f32 %v417, %v438
    %s440 = scalar_lea.vmem [#allocation7], 32
    %441 = vst [vmem:[%s440] sm:$0xff] %v439
    %v443 = vrot.slane %v439, 1
    %v444 = vrot.slane %v439, 2
    %v445 = vrot.slane %v439, 3
    %v446 = vrot.slane %v439, 4
    %v447 = vrot.slane %v439, 5
    %v448 = vrot.slane %v439, 6
    %v449 = vrot.slane %v439, 7
    %v450 = vperm.slane %v439, 0
    %v451 = vperm.slane %v443, 0
    %v452 = vperm.slane %v444, 0
    %v453 = vperm.slane %v445, 0
    %v454 = vperm.slane %v446, 0
    %v455 = vperm.slane %v447, 0
    %v456 = vperm.slane %v448, 0
    %v457 = vperm.slane %v449, 0
    %v466 = vmul.f32 %v56, %v450
    %v467 = vmul.f32 %v63, %v451
    %v468 = vmul.f32 %v70, %v452
    %v469 = vmul.f32 %v77, %v453
    %v470 = vmul.f32 %v84, %v454
    %v471 = vmul.f32 %v91, %v455
    %v472 = vmul.f32 %v98, %v456
    %v473 = vmul.f32 %v105, %v457
    %v474 = vadd.f32 %v466, %v467
    %v475 = vadd.f32 %v474, %v468
    %v476 = vadd.f32 %v475, %v469
    %v477 = vadd.f32 %v476, %v470
    %v478 = vadd.f32 %v477, %v471
    %v479 = vadd.f32 %v478, %v472
    %v480 = vadd.f32 %v479, %v473
    %s481 = scalar_lea.vmem [#allocation2], 40
    %v482 = vld [vmem:[%s481] sm:$0xff]
    %v483 = vxor.u32 %v482, 2147483648
    %v484 = vmul.f32 %v483, 1.442695
    %v485 = vpow.pop %v484
    %v486 = vadd.f32 %v485, 1.0
    %v487 = vrcp.pop %v486
    %v488 = vmul.f32 %v486, %v487
    %v489 = vsub.f32 1.0, %v488
    %v490 = vmul.f32 %v487, %v489
    %v491 = vadd.f32 %v487, %v490
    %vm492 = vweird.f32 %v486
    %vm493 = vweird.f32 %v487
    %vm494 = vmor %vm492, %vm493
    %v495 = vsel %vm494, %v487, %v491
    %v496 = vand.u32 2147483647, %v486
    %vm497 = vcmp.eq.f32.partialorder %v496, 8.507059e+37
    %v498 = vand.u32 %v486, 2147483648
    %v499 = vor.u32 1.1754944e-38, %v498
    %v500 = vsel %vm497, %v499, %v495
    %v501 = vmul.f32 1.0, %v500
    %v502 = vmul.f32 %v480, %v501
    %s503 = scalar_lea.vmem [#allocation7], 40
    %504 = vst [vmem:[%s503] sm:$0xff] %v502
    %v506 = vrot.slane %v502, 1
    %v507 = vrot.slane %v502, 2
    %v508 = vrot.slane %v502, 3
    %v509 = vrot.slane %v502, 4
    %v510 = vrot.slane %v502, 5
    %v511 = vrot.slane %v502, 6
    %v512 = vrot.slane %v502, 7
    %v513 = vperm.slane %v502, 0
    %v514 = vperm.slane %v506, 0
    %v515 = vperm.slane %v507, 0
    %v516 = vperm.slane %v508, 0
    %v517 = vperm.slane %v509, 0
    %v518 = vperm.slane %v510, 0
    %v519 = vperm.slane %v511, 0
    %v520 = vperm.slane %v512, 0
    %v529 = vmul.f32 %v56, %v513
    %v530 = vmul.f32 %v63, %v514
    %v531 = vmul.f32 %v70, %v515
    %v532 = vmul.f32 %v77, %v516
    %v533 = vmul.f32 %v84, %v517
    %v534 = vmul.f32 %v91, %v518
    %v535 = vmul.f32 %v98, %v519
    %v536 = vmul.f32 %v105, %v520
    %v537 = vadd.f32 %v529, %v530
    %v538 = vadd.f32 %v537, %v531
    %v539 = vadd.f32 %v538, %v532
    %v540 = vadd.f32 %v539, %v533
    %v541 = vadd.f32 %v540, %v534
    %v542 = vadd.f32 %v541, %v535
    %v543 = vadd.f32 %v542, %v536
    %s544 = scalar_lea.vmem [#allocation2], 48
    %v545 = vld [vmem:[%s544] sm:$0xff]
    %v546 = vxor.u32 %v545, 2147483648
    %v547 = vmul.f32 %v546, 1.442695
    %v548 = vpow.pop %v547
    %v549 = vadd.f32 %v548, 1.0
    %v550 = vrcp.pop %v549
    %v551 = vmul.f32 %v549, %v550
    %v552 = vsub.f32 1.0, %v551
    %v553 = vmul.f32 %v550, %v552
    %v554 = vadd.f32 %v550, %v553
    %vm555 = vweird.f32 %v549
    %vm556 = vweird.f32 %v550
    %vm557 = vmor %vm555, %vm556
    %v558 = vsel %vm557, %v550, %v554
    %v559 = vand.u32 2147483647, %v549
    %vm560 = vcmp.eq.f32.partialorder %v559, 8.507059e+37
    %v561 = vand.u32 %v549, 2147483648
    %v562 = vor.u32 1.1754944e-38, %v561
    %v563 = vsel %vm560, %v562, %v558
    %v564 = vmul.f32 1.0, %v563
    %v565 = vmul.f32 %v543, %v564
    %s566 = scalar_lea.vmem [#allocation7], 48
    %567 = vst [vmem:[%s566] sm:$0xff] %v565
    %v569 = vrot.slane %v565, 1
    %v570 = vrot.slane %v565, 2
    %v571 = vrot.slane %v565, 3
    %v572 = vrot.slane %v565, 4
    %v573 = vrot.slane %v565, 5
    %v574 = vrot.slane %v565, 6
    %v575 = vrot.slane %v565, 7
    %v576 = vperm.slane %v565, 0
    %v577 = vperm.slane %v569, 0
    %v578 = vperm.slane %v570, 0
    %v579 = vperm.slane %v571, 0
    %v580 = vperm.slane %v572, 0
    %v581 = vperm.slane %v573, 0
    %v582 = vperm.slane %v574, 0
    %v583 = vperm.slane %v575, 0
    %v592 = vmul.f32 %v56, %v576
    %v593 = vmul.f32 %v63, %v577
    %v594 = vmul.f32 %v70, %v578
    %v595 = vmul.f32 %v77, %v579
    %v596 = vmul.f32 %v84, %v580
    %v597 = vmul.f32 %v91, %v581
    %v598 = vmul.f32 %v98, %v582
    %v599 = vmul.f32 %v105, %v583
    %v600 = vadd.f32 %v592, %v593
    %v601 = vadd.f32 %v600, %v594
    %v602 = vadd.f32 %v601, %v595
    %v603 = vadd.f32 %v602, %v596
    %v604 = vadd.f32 %v603, %v597
    %v605 = vadd.f32 %v604, %v598
    %v606 = vadd.f32 %v605, %v599
    %s607 = scalar_lea.vmem [#allocation2], 56
    %v608 = vld [vmem:[%s607] sm:$0xff]
    %v609 = vxor.u32 %v608, 2147483648
    %v610 = vmul.f32 %v609, 1.442695
    %v611 = vpow.pop %v610
    %v612 = vadd.f32 %v611, 1.0
    %v613 = vrcp.pop %v612
    %v614 = vmul.f32 %v612, %v613
    %v615 = vsub.f32 1.0, %v614
    %v616 = vmul.f32 %v613, %v615
    %v617 = vadd.f32 %v613, %v616
    %vm618 = vweird.f32 %v612
    %vm619 = vweird.f32 %v613
    %vm620 = vmor %vm618, %vm619
    %v621 = vsel %vm620, %v613, %v617
    %v622 = vand.u32 2147483647, %v612
    %vm623 = vcmp.eq.f32.partialorder %v622, 8.507059e+37
    %v624 = vand.u32 %v612, 2147483648
    %v625 = vor.u32 1.1754944e-38, %v624
    %v626 = vsel %vm623, %v625, %v621
    %v627 = vmul.f32 1.0, %v626
    %v628 = vmul.f32 %v606, %v627
    %s629 = scalar_lea.vmem [#allocation7], 56
    %630 = vst [vmem:[%s629] sm:$0xff] %v628
    %v631 = vld [vmem:[%s629] sm:$0xff]
    %v632 = vrot.slane %v631, 4
    %v633 = vadd.f32 %v631, %v632
    %v634 = vrot.slane %v633, 2
    %v635 = vadd.f32 %v633, %v634
    %v636 = vrot.slane %v635, 1
    %v637 = vadd.f32 %v635, %v636
    %v638 = vadd.f32 %v637, 1e-30
    %v639 = vrcp.pop %v638
    %v640 = vmul.f32 %v638, %v639
    %v641 = vsub.f32 2.0, %v640
    %v642 = vmul.f32 %v639, %v641
    %v643 = vmul.f32 %v631, %v642
    %644 = vst [vmem:[%s629] sm:$0xff] %v643
    %v645 = vld [vmem:[%s607] sm:$0xff]
    %v646 = vxor.u32 %v645, 2147483648
    %v647 = vmul.f32 %v646, 1.442695
    %v648 = vpow.pop %v647
    %v649 = vadd.f32 %v648, 1.0
    %v650 = vrcp.pop %v649
    %v651 = vmul.f32 %v649, %v650
    %v652 = vsub.f32 1.0, %v651
    %v653 = vmul.f32 %v650, %v652
    %v654 = vadd.f32 %v650, %v653
    %vm655 = vweird.f32 %v649
    %vm656 = vweird.f32 %v650
    %vm657 = vmor %vm655, %vm656
    %v658 = vsel %vm657, %v650, %v654
    %v659 = vand.u32 2147483647, %v649
    %vm660 = vcmp.eq.f32.partialorder %v659, 8.507059e+37
    %v661 = vand.u32 %v649, 2147483648
    %v662 = vor.u32 1.1754944e-38, %v661
    %v663 = vsel %vm660, %v662, %v658
    %v664 = vmul.f32 1.0, %v663
    %v666 = vrot.slane %v664, 1
    %v667 = vrot.slane %v664, 2
    %v668 = vrot.slane %v664, 3
    %v669 = vrot.slane %v664, 4
    %v670 = vrot.slane %v664, 5
    %v671 = vrot.slane %v664, 6
    %v672 = vrot.slane %v664, 7
    %v673 = vperm.slane %v664, 0
    %v674 = vperm.slane %v666, 0
    %v675 = vperm.slane %v667, 0
    %v676 = vperm.slane %v668, 0
    %v677 = vperm.slane %v669, 0
    %v678 = vperm.slane %v670, 0
    %v679 = vperm.slane %v671, 0
    %v680 = vperm.slane %v672, 0
    %v689 = vmul.f32 %v112, %v673
    %v690 = vmul.f32 %v119, %v674
    %v691 = vmul.f32 %v126, %v675
    %v692 = vmul.f32 %v133, %v676
    %v693 = vmul.f32 %v140, %v677
    %v694 = vmul.f32 %v147, %v678
    %v695 = vmul.f32 %v154, %v679
    %v696 = vmul.f32 %v161, %v680
    %v697 = vadd.f32 %v689, %v690
    %v698 = vadd.f32 %v697, %v691
    %v699 = vadd.f32 %v698, %v692
    %v700 = vadd.f32 %v699, %v693
    %v701 = vadd.f32 %v700, %v694
    %v702 = vadd.f32 %v701, %v695
    %v703 = vadd.f32 %v702, %v696
    %v704 = vld [vmem:[%s566] sm:$0xff]
    %v705 = vmul.f32 %v704, %v703
    %v706 = vrot.slane %v705, 4
    %v707 = vadd.f32 %v705, %v706
    %v708 = vrot.slane %v707, 2
    %v709 = vadd.f32 %v707, %v708
    %v710 = vrot.slane %v709, 1
    %v711 = vadd.f32 %v709, %v710
    %v712 = vadd.f32 %v711, 1e-30
    %v713 = vrcp.pop %v712
    %v714 = vmul.f32 %v712, %v713
    %v715 = vsub.f32 2.0, %v714
    %v716 = vmul.f32 %v713, %v715
    %v717 = vmul.f32 %v705, %v716
    %718 = vst [vmem:[%s566] sm:$0xff] %v717
    %v719 = vld [vmem:[%s544] sm:$0xff]
    %v720 = vxor.u32 %v719, 2147483648
    %v721 = vmul.f32 %v720, 1.442695
    %v722 = vpow.pop %v721
    %v723 = vadd.f32 %v722, 1.0
    %v724 = vrcp.pop %v723
    %v725 = vmul.f32 %v723, %v724
    %v726 = vsub.f32 1.0, %v725
    %v727 = vmul.f32 %v724, %v726
    %v728 = vadd.f32 %v724, %v727
    %vm729 = vweird.f32 %v723
    %vm730 = vweird.f32 %v724
    %vm731 = vmor %vm729, %vm730
    %v732 = vsel %vm731, %v724, %v728
    %v733 = vand.u32 2147483647, %v723
    %vm734 = vcmp.eq.f32.partialorder %v733, 8.507059e+37
    %v735 = vand.u32 %v723, 2147483648
    %v736 = vor.u32 1.1754944e-38, %v735
    %v737 = vsel %vm734, %v736, %v732
    %v738 = vmul.f32 1.0, %v737
    %v739 = vmul.f32 %v738, %v703
    %v741 = vrot.slane %v739, 1
    %v742 = vrot.slane %v739, 2
    %v743 = vrot.slane %v739, 3
    %v744 = vrot.slane %v739, 4
    %v745 = vrot.slane %v739, 5
    %v746 = vrot.slane %v739, 6
    %v747 = vrot.slane %v739, 7
    %v748 = vperm.slane %v739, 0
    %v749 = vperm.slane %v741, 0
    %v750 = vperm.slane %v742, 0
    %v751 = vperm.slane %v743, 0
    %v752 = vperm.slane %v744, 0
    %v753 = vperm.slane %v745, 0
    %v754 = vperm.slane %v746, 0
    %v755 = vperm.slane %v747, 0
    %v764 = vmul.f32 %v112, %v748
    %v765 = vmul.f32 %v119, %v749
    %v766 = vmul.f32 %v126, %v750
    %v767 = vmul.f32 %v133, %v751
    %v768 = vmul.f32 %v140, %v752
    %v769 = vmul.f32 %v147, %v753
    %v770 = vmul.f32 %v154, %v754
    %v771 = vmul.f32 %v161, %v755
    %v772 = vadd.f32 %v764, %v765
    %v773 = vadd.f32 %v772, %v766
    %v774 = vadd.f32 %v773, %v767
    %v775 = vadd.f32 %v774, %v768
    %v776 = vadd.f32 %v775, %v769
    %v777 = vadd.f32 %v776, %v770
    %v778 = vadd.f32 %v777, %v771
    %v779 = vld [vmem:[%s503] sm:$0xff]
    %v780 = vmul.f32 %v779, %v778
    %v781 = vrot.slane %v780, 4
    %v782 = vadd.f32 %v780, %v781
    %v783 = vrot.slane %v782, 2
    %v784 = vadd.f32 %v782, %v783
    %v785 = vrot.slane %v784, 1
    %v786 = vadd.f32 %v784, %v785
    %v787 = vadd.f32 %v786, 1e-30
    %v788 = vrcp.pop %v787
    %v789 = vmul.f32 %v787, %v788
    %v790 = vsub.f32 2.0, %v789
    %v791 = vmul.f32 %v788, %v790
    %v792 = vmul.f32 %v780, %v791
    %793 = vst [vmem:[%s503] sm:$0xff] %v792
    %v794 = vld [vmem:[%s481] sm:$0xff]
    %v795 = vxor.u32 %v794, 2147483648
    %v796 = vmul.f32 %v795, 1.442695
    %v797 = vpow.pop %v796
    %v798 = vadd.f32 %v797, 1.0
    %v799 = vrcp.pop %v798
    %v800 = vmul.f32 %v798, %v799
    %v801 = vsub.f32 1.0, %v800
    %v802 = vmul.f32 %v799, %v801
    %v803 = vadd.f32 %v799, %v802
    %vm804 = vweird.f32 %v798
    %vm805 = vweird.f32 %v799
    %vm806 = vmor %vm804, %vm805
    %v807 = vsel %vm806, %v799, %v803
    %v808 = vand.u32 2147483647, %v798
    %vm809 = vcmp.eq.f32.partialorder %v808, 8.507059e+37
    %v810 = vand.u32 %v798, 2147483648
    %v811 = vor.u32 1.1754944e-38, %v810
    %v812 = vsel %vm809, %v811, %v807
    %v813 = vmul.f32 1.0, %v812
    %v814 = vmul.f32 %v813, %v778
    %v816 = vrot.slane %v814, 1
    %v817 = vrot.slane %v814, 2
    %v818 = vrot.slane %v814, 3
    %v819 = vrot.slane %v814, 4
    %v820 = vrot.slane %v814, 5
    %v821 = vrot.slane %v814, 6
    %v822 = vrot.slane %v814, 7
    %v823 = vperm.slane %v814, 0
    %v824 = vperm.slane %v816, 0
    %v825 = vperm.slane %v817, 0
    %v826 = vperm.slane %v818, 0
    %v827 = vperm.slane %v819, 0
    %v828 = vperm.slane %v820, 0
    %v829 = vperm.slane %v821, 0
    %v830 = vperm.slane %v822, 0
    %v839 = vmul.f32 %v112, %v823
    %v840 = vmul.f32 %v119, %v824
    %v841 = vmul.f32 %v126, %v825
    %v842 = vmul.f32 %v133, %v826
    %v843 = vmul.f32 %v140, %v827
    %v844 = vmul.f32 %v147, %v828
    %v845 = vmul.f32 %v154, %v829
    %v846 = vmul.f32 %v161, %v830
    %v847 = vadd.f32 %v839, %v840
    %v848 = vadd.f32 %v847, %v841
    %v849 = vadd.f32 %v848, %v842
    %v850 = vadd.f32 %v849, %v843
    %v851 = vadd.f32 %v850, %v844
    %v852 = vadd.f32 %v851, %v845
    %v853 = vadd.f32 %v852, %v846
    %v854 = vld [vmem:[%s440] sm:$0xff]
    %v855 = vmul.f32 %v854, %v853
    %v856 = vrot.slane %v855, 4
    %v857 = vadd.f32 %v855, %v856
    %v858 = vrot.slane %v857, 2
    %v859 = vadd.f32 %v857, %v858
    %v860 = vrot.slane %v859, 1
    %v861 = vadd.f32 %v859, %v860
    %v862 = vadd.f32 %v861, 1e-30
    %v863 = vrcp.pop %v862
    %v864 = vmul.f32 %v862, %v863
    %v865 = vsub.f32 2.0, %v864
    %v866 = vmul.f32 %v863, %v865
    %v867 = vmul.f32 %v855, %v866
    %868 = vst [vmem:[%s440] sm:$0xff] %v867
    %v869 = vld [vmem:[%s418] sm:$0xff]
    %v870 = vxor.u32 %v869, 2147483648
    %v871 = vmul.f32 %v870, 1.442695
    %v872 = vpow.pop %v871
    %v873 = vadd.f32 %v872, 1.0
    %v874 = vrcp.pop %v873
    %v875 = vmul.f32 %v873, %v874
    %v876 = vsub.f32 1.0, %v875
    %v877 = vmul.f32 %v874, %v876
    %v878 = vadd.f32 %v874, %v877
    %vm879 = vweird.f32 %v873
    %vm880 = vweird.f32 %v874
    %vm881 = vmor %vm879, %vm880
    %v882 = vsel %vm881, %v874, %v878
    %v883 = vand.u32 2147483647, %v873
    %vm884 = vcmp.eq.f32.partialorder %v883, 8.507059e+37
    %v885 = vand.u32 %v873, 2147483648
    %v886 = vor.u32 1.1754944e-38, %v885
    %v887 = vsel %vm884, %v886, %v882
    %v888 = vmul.f32 1.0, %v887
    %v889 = vmul.f32 %v888, %v853
    %v891 = vrot.slane %v889, 1
    %v892 = vrot.slane %v889, 2
    %v893 = vrot.slane %v889, 3
    %v894 = vrot.slane %v889, 4
    %v895 = vrot.slane %v889, 5
    %v896 = vrot.slane %v889, 6
    %v897 = vrot.slane %v889, 7
    %v898 = vperm.slane %v889, 0
    %v899 = vperm.slane %v891, 0
    %v900 = vperm.slane %v892, 0
    %v901 = vperm.slane %v893, 0
    %v902 = vperm.slane %v894, 0
    %v903 = vperm.slane %v895, 0
    %v904 = vperm.slane %v896, 0
    %v905 = vperm.slane %v897, 0
    %v914 = vmul.f32 %v112, %v898
    %v915 = vmul.f32 %v119, %v899
    %v916 = vmul.f32 %v126, %v900
    %v917 = vmul.f32 %v133, %v901
    %v918 = vmul.f32 %v140, %v902
    %v919 = vmul.f32 %v147, %v903
    %v920 = vmul.f32 %v154, %v904
    %v921 = vmul.f32 %v161, %v905
    %v922 = vadd.f32 %v914, %v915
    %v923 = vadd.f32 %v922, %v916
    %v924 = vadd.f32 %v923, %v917
    %v925 = vadd.f32 %v924, %v918
    %v926 = vadd.f32 %v925, %v919
    %v927 = vadd.f32 %v926, %v920
    %v928 = vadd.f32 %v927, %v921
    %v929 = vld [vmem:[%s377] sm:$0xff]
    %v930 = vmul.f32 %v929, %v928
    %v931 = vrot.slane %v930, 4
    %v932 = vadd.f32 %v930, %v931
    %v933 = vrot.slane %v932, 2
    %v934 = vadd.f32 %v932, %v933
    %v935 = vrot.slane %v934, 1
    %v936 = vadd.f32 %v934, %v935
    %v937 = vadd.f32 %v936, 1e-30
    %v938 = vrcp.pop %v937
    %v939 = vmul.f32 %v937, %v938
    %v940 = vsub.f32 2.0, %v939
    %v941 = vmul.f32 %v938, %v940
    %v942 = vmul.f32 %v930, %v941
    %943 = vst [vmem:[%s377] sm:$0xff] %v942
    %v944 = vld [vmem:[%s355] sm:$0xff]
    %v945 = vxor.u32 %v944, 2147483648
    %v946 = vmul.f32 %v945, 1.442695
    %v947 = vpow.pop %v946
    %v948 = vadd.f32 %v947, 1.0
    %v949 = vrcp.pop %v948
    %v950 = vmul.f32 %v948, %v949
    %v951 = vsub.f32 1.0, %v950
    %v952 = vmul.f32 %v949, %v951
    %v953 = vadd.f32 %v949, %v952
    %vm954 = vweird.f32 %v948
    %vm955 = vweird.f32 %v949
    %vm956 = vmor %vm954, %vm955
    %v957 = vsel %vm956, %v949, %v953
    %v958 = vand.u32 2147483647, %v948
    %vm959 = vcmp.eq.f32.partialorder %v958, 8.507059e+37
    %v960 = vand.u32 %v948, 2147483648
    %v961 = vor.u32 1.1754944e-38, %v960
    %v962 = vsel %vm959, %v961, %v957
    %v963 = vmul.f32 1.0, %v962
    %v964 = vmul.f32 %v963, %v928
    %v966 = vrot.slane %v964, 1
    %v967 = vrot.slane %v964, 2
    %v968 = vrot.slane %v964, 3
    %v969 = vrot.slane %v964, 4
    %v970 = vrot.slane %v964, 5
    %v971 = vrot.slane %v964, 6
    %v972 = vrot.slane %v964, 7
    %v973 = vperm.slane %v964, 0
    %v974 = vperm.slane %v966, 0
    %v975 = vperm.slane %v967, 0
    %v976 = vperm.slane %v968, 0
    %v977 = vperm.slane %v969, 0
    %v978 = vperm.slane %v970, 0
    %v979 = vperm.slane %v971, 0
    %v980 = vperm.slane %v972, 0
    %v989 = vmul.f32 %v112, %v973
    %v990 = vmul.f32 %v119, %v974
    %v991 = vmul.f32 %v126, %v975
    %v992 = vmul.f32 %v133, %v976
    %v993 = vmul.f32 %v140, %v977
    %v994 = vmul.f32 %v147, %v978
    %v995 = vmul.f32 %v154, %v979
    %v996 = vmul.f32 %v161, %v980
    %v997 = vadd.f32 %v989, %v990
    %v998 = vadd.f32 %v997, %v991
    %v999 = vadd.f32 %v998, %v992
    %v1000 = vadd.f32 %v999, %v993
    %v1001 = vadd.f32 %v1000, %v994
    %v1002 = vadd.f32 %v1001, %v995
    %v1003 = vadd.f32 %v1002, %v996
    %v1004 = vld [vmem:[%s314] sm:$0xff]
    %v1005 = vmul.f32 %v1004, %v1003
    %v1006 = vrot.slane %v1005, 4
    %v1007 = vadd.f32 %v1005, %v1006
    %v1008 = vrot.slane %v1007, 2
    %v1009 = vadd.f32 %v1007, %v1008
    %v1010 = vrot.slane %v1009, 1
    %v1011 = vadd.f32 %v1009, %v1010
    %v1012 = vadd.f32 %v1011, 1e-30
    %v1013 = vrcp.pop %v1012
    %v1014 = vmul.f32 %v1012, %v1013
    %v1015 = vsub.f32 2.0, %v1014
    %v1016 = vmul.f32 %v1013, %v1015
    %v1017 = vmul.f32 %v1005, %v1016
    %1018 = vst [vmem:[%s314] sm:$0xff] %v1017
    %v1019 = vld [vmem:[%s292] sm:$0xff]
    %v1020 = vxor.u32 %v1019, 2147483648
    %v1021 = vmul.f32 %v1020, 1.442695
    %v1022 = vpow.pop %v1021
    %v1023 = vadd.f32 %v1022, 1.0
    %v1024 = vrcp.pop %v1023
    %v1025 = vmul.f32 %v1023, %v1024
    %v1026 = vsub.f32 1.0, %v1025
    %v1027 = vmul.f32 %v1024, %v1026
    %v1028 = vadd.f32 %v1024, %v1027
    %vm1029 = vweird.f32 %v1023
    %vm1030 = vweird.f32 %v1024
    %vm1031 = vmor %vm1029, %vm1030
    %v1032 = vsel %vm1031, %v1024, %v1028
    %v1033 = vand.u32 2147483647, %v1023
    %vm1034 = vcmp.eq.f32.partialorder %v1033, 8.507059e+37
    %v1035 = vand.u32 %v1023, 2147483648
    %v1036 = vor.u32 1.1754944e-38, %v1035
    %v1037 = vsel %vm1034, %v1036, %v1032
    %v1038 = vmul.f32 1.0, %v1037
    %v1039 = vmul.f32 %v1038, %v1003
    %v1041 = vrot.slane %v1039, 1
    %v1042 = vrot.slane %v1039, 2
    %v1043 = vrot.slane %v1039, 3
    %v1044 = vrot.slane %v1039, 4
    %v1045 = vrot.slane %v1039, 5
    %v1046 = vrot.slane %v1039, 6
    %v1047 = vrot.slane %v1039, 7
    %v1048 = vperm.slane %v1039, 0
    %v1049 = vperm.slane %v1041, 0
    %v1050 = vperm.slane %v1042, 0
    %v1051 = vperm.slane %v1043, 0
    %v1052 = vperm.slane %v1044, 0
    %v1053 = vperm.slane %v1045, 0
    %v1054 = vperm.slane %v1046, 0
    %v1055 = vperm.slane %v1047, 0
    %v1064 = vmul.f32 %v112, %v1048
    %v1065 = vmul.f32 %v119, %v1049
    %v1066 = vmul.f32 %v126, %v1050
    %v1067 = vmul.f32 %v133, %v1051
    %v1068 = vmul.f32 %v140, %v1052
    %v1069 = vmul.f32 %v147, %v1053
    %v1070 = vmul.f32 %v154, %v1054
    %v1071 = vmul.f32 %v161, %v1055
    %v1072 = vadd.f32 %v1064, %v1065
    %v1073 = vadd.f32 %v1072, %v1066
    %v1074 = vadd.f32 %v1073, %v1067
    %v1075 = vadd.f32 %v1074, %v1068
    %v1076 = vadd.f32 %v1075, %v1069
    %v1077 = vadd.f32 %v1076, %v1070
    %v1078 = vadd.f32 %v1077, %v1071
    %v1079 = vld [vmem:[%s251] sm:$0xff]
    %v1080 = vmul.f32 %v1079, %v1078
    %v1081 = vrot.slane %v1080, 4
    %v1082 = vadd.f32 %v1080, %v1081
    %v1083 = vrot.slane %v1082, 2
    %v1084 = vadd.f32 %v1082, %v1083
    %v1085 = vrot.slane %v1084, 1
    %v1086 = vadd.f32 %v1084, %v1085
    %v1087 = vadd.f32 %v1086, 1e-30
    %v1088 = vrcp.pop %v1087
    %v1089 = vmul.f32 %v1087, %v1088
    %v1090 = vsub.f32 2.0, %v1089
    %v1091 = vmul.f32 %v1088, %v1090
    %v1092 = vmul.f32 %v1080, %v1091
    %1093 = vst [vmem:[%s251] sm:$0xff] %v1092
    %v1094 = vld [vmem:[%s229] sm:$0xff]
    %v1095 = vxor.u32 %v1094, 2147483648
    %v1096 = vmul.f32 %v1095, 1.442695
    %v1097 = vpow.pop %v1096
    %v1098 = vadd.f32 %v1097, 1.0
    %v1099 = vrcp.pop %v1098
    %v1100 = vmul.f32 %v1098, %v1099
    %v1101 = vsub.f32 1.0, %v1100
    %v1102 = vmul.f32 %v1099, %v1101
    %v1103 = vadd.f32 %v1099, %v1102
    %vm1104 = vweird.f32 %v1098
    %vm1105 = vweird.f32 %v1099
    %vm1106 = vmor %vm1104, %vm1105
    %v1107 = vsel %vm1106, %v1099, %v1103
    %v1108 = vand.u32 2147483647, %v1098
    %vm1109 = vcmp.eq.f32.partialorder %v1108, 8.507059e+37
    %v1110 = vand.u32 %v1098, 2147483648
    %v1111 = vor.u32 1.1754944e-38, %v1110
    %v1112 = vsel %vm1109, %v1111, %v1107
    %v1113 = vmul.f32 1.0, %v1112
    %v1114 = vmul.f32 %v1113, %v1078
    %v1116 = vrot.slane %v1114, 1
    %v1117 = vrot.slane %v1114, 2
    %v1118 = vrot.slane %v1114, 3
    %v1119 = vrot.slane %v1114, 4
    %v1120 = vrot.slane %v1114, 5
    %v1121 = vrot.slane %v1114, 6
    %v1122 = vrot.slane %v1114, 7
    %v1123 = vperm.slane %v1114, 0
    %v1124 = vperm.slane %v1116, 0
    %v1125 = vperm.slane %v1117, 0
    %v1126 = vperm.slane %v1118, 0
    %v1127 = vperm.slane %v1119, 0
    %v1128 = vperm.slane %v1120, 0
    %v1129 = vperm.slane %v1121, 0
    %v1130 = vperm.slane %v1122, 0
    %v1139 = vmul.f32 %v112, %v1123
    %v1140 = vmul.f32 %v119, %v1124
    %v1141 = vmul.f32 %v126, %v1125
    %v1142 = vmul.f32 %v133, %v1126
    %v1143 = vmul.f32 %v140, %v1127
    %v1144 = vmul.f32 %v147, %v1128
    %v1145 = vmul.f32 %v154, %v1129
    %v1146 = vmul.f32 %v161, %v1130
    %v1147 = vadd.f32 %v1139, %v1140
    %v1148 = vadd.f32 %v1147, %v1141
    %v1149 = vadd.f32 %v1148, %v1142
    %v1150 = vadd.f32 %v1149, %v1143
    %v1151 = vadd.f32 %v1150, %v1144
    %v1152 = vadd.f32 %v1151, %v1145
    %v1153 = vadd.f32 %v1152, %v1146
    %v1154 = vld [vmem:[#allocation7] sm:$0xff]
    %v1155 = vmul.f32 %v1154, %v1153
    %v1156 = vrot.slane %v1155, 4
    %v1157 = vadd.f32 %v1155, %v1156
    %v1158 = vrot.slane %v1157, 2
    %v1159 = vadd.f32 %v1157, %v1158
    %v1160 = vrot.slane %v1159, 1
    %v1161 = vadd.f32 %v1159, %v1160
    %v1162 = vadd.f32 %v1161, 1e-30
    %v1163 = vrcp.pop %v1162
    %v1164 = vmul.f32 %v1162, %v1163
    %v1165 = vsub.f32 2.0, %v1164
    %v1166 = vmul.f32 %v1163, %v1165
    %v1167 = vmul.f32 %v1155, %v1166
    %1168 = vst [vmem:[#allocation7] sm:$0xff] %v1167
    // Predicated region
    $region26: #{tpu_custom_call.1} parent=1 // pred_check
      _
    $region27: #{tpu_custom_call.1} parent=1 // pred_check_branch
      %1170 = sbr.rel (0) target = $region29
    $region28: #{tpu_custom_call.1} parent=1 // pred_region
      %1172 = vsyncadd [#allocation4], 0
      %s1173 = sshll.u32 [#allocation7], 4
      %s1174 = int_to_ptr.vmem [resolvable:$true] %s1173
      %s1175 = sshll.u32 %s4, 4
      %s1176 = int_to_ptr.hbm [resolvable:$true] %s1175
      %1181 = dma.vmem_to_hbm [thread:$0]  %s1174, 1024, %s1176, [#allocation4], 128, 128, 8
    $region29: #{tpu_custom_call.1} parent=1 // pred_fallthru
      _
    // Predicated region
    $region30: #{tpu_custom_call.1} parent=1 // pred_check
      _
    $region31: #{tpu_custom_call.1} parent=1 // pred_check_branch
      %1183 = sbr.rel (0) target = $region33
    $region32: #{tpu_custom_call.1} parent=1 // pred_region
      %1185 = dma.done [#allocation4], 1024
    $region33: #{tpu_custom_call.1} parent=1 // pred_fallthru
      _
    %1186 = vsyncpa [#allocation3], 1
    %1187 = vsyncpa [#allocation6], 1
    %1188 = vsyncpa [#allocation4], 1

</llo_original>
